<compile_context>
chip_gen: v7x
topology: tpu7x:2x2x1
jax: 0.10.0
libtpu: 0.0.40
codegen_flags: <defaults>
</compile_context>

<pallas_src>
import functools
import math

import jax
import jax.numpy as jnp
from jax.experimental import pallas as pl
from jax.experimental.pallas import tpu as pltpu

# ----------------------------- configuration --------------------------------
B, T, N_MEL = 2, 16, 16          # batch, time (multiple of 8), mel bins
D_R, D_C, D_SPK, D_HID = 4, 8, 8, 32
KSIZE = 3                        # conv1d kernel width in Er / Ec
NUM_BINS = 256                   # quantize_f0_torch: 256 bins -> 257-wide one-hot
NB1 = NUM_BINS + 1               # 257 (module contract)
NB_PAD = ((NB1 + 127) // 128) * 128   # 384: lane-dense padded one-hot width
TC = T // 8                      # code-rate timesteps
MC = B * TC                      # code-rate rows
DRC = D_R + D_C


# ------------------------------ helpers --------------------------------------
def _vspec(shape):
    """Full-array block (grid=(1,)) — satisfies the (8,128) rule via full dims."""
    zeros = (0,) * len(shape)
    return pl.BlockSpec(shape, lambda i, zeros=zeros: zeros)


# ------------------------------ fused kernel ---------------------------------
def _generator_kernel(mel_g_ref, sp_ref,
                      w1_ref, b1_ref, w2_ref, b2_ref,
                      w_pd1_ref, wp1s_ref, bp1_ref, wp2_ref, bp2_ref,
                      wd1p_ref, bd1_ref, wd2_ref, bd2_ref,
                      mel128_ref, oh1_ref, oh2_ref, codes1_ref, codes2_ref,
                      *, mc, tc, c, h, num_bins, nb_pad):
    """Whole generator forward (both passes) in one kernel invocation.

    mel_g is mel_in laid out as (Mc, 8*C): group-of-8 timesteps packed along
    lanes, so the k=3 conv taps at code rate are static lane slices (t, t+1)
    plus one per-batch previous-row shift (t-1).
    """
    f32 = jnp.float32
    mel_g = mel_g_ref[...]                       # (Mc, 8C)  [slot0 | slot1 | ... | slot7]
    b1 = b1_ref[...]
    b2 = b2_ref[...]
    w2 = w2_ref[...]
    w_pd1 = w_pd1_ref[...]
    bp1 = bp1_ref[...]
    wp2 = wp2_ref[...]
    bp2 = bp2_ref[...]
    wd1p = wd1p_ref[...]
    bd1 = bd1_ref[...]
    wd2 = wd2_ref[...]
    bd2 = bd2_ref[...]

    # conv taps: w1 rows [0:C]=x[t-1], [C:2C]=x[t], [2C:3C]=x[t+1]; Er|Ec packed along N.
    w1_a = w1_ref[0:c, :]                        # (C, 2H)
    w1_bc = w1_ref[c:3 * c, :]                   # (2C, 2H)  taps t, t+1 stacked
    w1_bpc = w1_ref[c:2 * c, :] + w1_ref[2 * c:3 * c, :]   # (C, 2H) for pass 2 (x[t]==x[t+1])

    # Per-batch previous-code-step shift: (S @ v)[r] = v[r-1] if r % Tc != 0 else 0.
    r_idx = jax.lax.broadcasted_iota(jnp.int32, (mc, mc), 0)
    q_idx = jax.lax.broadcasted_iota(jnp.int32, (mc, mc), 1)
    shift = jnp.where((q_idx == r_idx - 1) & (r_idx % tc != 0), 1.0, 0.0)

    # x8 lane-replication matrix: (v @ R)[r, k] = v[r, k % C]  -> lane-dense mel store.
    rr = jax.lax.broadcasted_iota(jnp.int32, (c, 8 * c), 0)
    rc = jax.lax.broadcasted_iota(jnp.int32, (c, 8 * c), 1)
    rep8 = jnp.where(rc % c == rr, 1.0, 0.0)

    # Speaker-id contribution to the pitch hidden layer (shared by both passes).
    sp_h = jnp.dot(sp_ref[...], wp1s_ref[...], preferred_element_type=f32)   # (Mc, H)

    cols = jax.lax.broadcasted_iota(jnp.int32, (mc, nb_pad), 1)

    def encoders(x_m1, x_rest, w_rest):
        # Fused Er+Ec: conv1d(k=3,'same') at code rate as accumulated dots,
        # ReLU, then block-diagonal second layer -> rhythm||content.
        henc = jnp.dot(x_m1, w1_a, preferred_element_type=f32)
        henc = henc + jnp.dot(x_rest, w_rest, preferred_element_type=f32)
        henc = jnp.maximum(henc + b1, 0.0)
        return jnp.dot(henc, w2, preferred_element_type=f32) + b2            # (Mc, D_R+D_C)

    def pitch_and_onehot(hp_pre):
        hp = jnp.maximum(hp_pre + sp_h + bp1, 0.0)
        # N=1 pitch head on the VPU (broadcast-mul + lane reduction) — skip the MXU.
        pitch = jnp.sum(hp * wp2, axis=-1, keepdims=True) + bp2              # (Mc, 1)
        uv = pitch <= 0.0
        # TODO(synk): original quantize_f0_torch asserts 0 <= x <= 1; we clip instead.
        xq = jnp.clip(jnp.where(uv, 0.0, pitch), 0.0, 1.0)
        idx = jnp.where(uv, 0.0, jnp.round(xq * (num_bins - 1)) + 1.0).astype(jnp.int32)
        onehot = (cols == idx).astype(f32)        # (Mc, nb_pad); cols >= 257 stay zero
        return pitch, onehot

    # ------------------------------ pass 1 -----------------------------------
    # taps from mel_in: t -> lanes [0:C], t+1 -> lanes [C:2C], t-1 -> shifted slot-7 lanes.
    x_m1_1 = jnp.dot(shift, mel_g[:, 7 * c:8 * c], preferred_element_type=f32)
    codes1 = encoders(x_m1_1, mel_g[:, 0:2 * c], w1_bc)
    codes1_ref[...] = codes1.astype(codes1_ref.dtype)

    # Pitch and decoder first layers share `codes` -> one packed MXU pass, sliced in vregs.
    hcat1 = jnp.dot(codes1, w_pd1, preferred_element_type=f32)               # (Mc, 2H)
    pitch1, oh1 = pitch_and_onehot(hcat1[:, :h])
    # repeat_interleave(8, time) as a broadcast store; 384 lanes -> unmasked vst.
    oh1_ref[...] = jnp.broadcast_to(oh1[:, None, :], oh1_ref.shape)

    hd1 = jnp.maximum(hcat1[:, h:] + pitch1 * wd1p + bd1, 0.0)
    mel_code = jnp.dot(hd1, wd2, preferred_element_type=f32) + bd2           # (Mc, C)
    # Lane-dense x8 repeat: (Mc, 128) slab, one unmasked 128-lane store per row.
    mel128_ref[...] = jnp.dot(mel_code, rep8,
                              preferred_element_type=f32).astype(mel128_ref.dtype)

    # ------------------------------ pass 2 -----------------------------------
    # mel_output rows inside a x8 group are identical, so its conv taps at code
    # rate are: x[t] = x[t+1] = mel_code[cs], x[t-1] = mel_code[cs-1] (0 at batch
    # start) — the full-rate mel never needs to be re-read from HBM.
    mel_m1 = jnp.dot(shift, mel_code, preferred_element_type=f32)
    codes2 = encoders(mel_m1, mel_code, w1_bpc)
    codes2_ref[...] = codes2.astype(codes2_ref.dtype)

    hcat2 = jnp.dot(codes2, w_pd1, preferred_element_type=f32)
    _, oh2 = pitch_and_onehot(hcat2[:, :h])
    oh2_ref[...] = jnp.broadcast_to(oh2[:, None, :], oh2_ref.shape)


# ------------------------------ pallas_call wrapper ---------------------------
_COMPILER = pltpu.CompilerParams(dimension_semantics=("arbitrary",))
# NOTE(scaling): at Mc = B*T/8 = 4 a single block is optimal (launch-bound).  When
# B*T grows, split Mc into row blocks on a "parallel" grid axis (keeps both v7x
# TensorCores busy and keeps the double-buffered 384-wide one-hot blocks inside
# v7x's 64 MiB VMEM / v5e's 16 MiB default scoped limit).


def fused_generator(mel_g, sp_code, packed, *, tc):
    mc, lanes = mel_g.shape
    c = lanes // 8
    h = D_HID
    w1, b1, w2, b2 = packed["enc"]
    w_pd1, wp1s, bp1, wp2, bp2 = packed["P"]
    wd1p, bd1, wd2, bd2 = packed["Ds"]
    args = (mel_g, sp_code, w1, b1, w2, b2,
            w_pd1, wp1s, bp1, wp2, bp2, wd1p, bd1, wd2, bd2)

    out_shapes = (
        jax.ShapeDtypeStruct((mc, 8 * c), jnp.float32),      # decoder mel, x8 lane-tiled
        jax.ShapeDtypeStruct((mc, 8, NB_PAD), jnp.float32),  # one-hot pass 1 (padded lanes)
        jax.ShapeDtypeStruct((mc, 8, NB_PAD), jnp.float32),  # one-hot pass 2 (padded lanes)
        jax.ShapeDtypeStruct((mc, DRC), jnp.float32),        # rhythm || content
        jax.ShapeDtypeStruct((mc, DRC), jnp.float32),        # rhythm_r || content_r
    )

    # Advisory cost estimate (lets XLA schedule the reshape/slice glue around the call).
    flops = 2 * mc * (
        2 * mc * c                    # shift matmuls (both passes)
        + 3 * c * 2 * h               # pass-1 encoder first layer
        + 2 * c * 2 * h               # pass-2 encoder first layer
        + 2 * 2 * h * DRC             # encoder second layer (both passes)
        + 2 * DRC * 2 * h             # packed pitch|decoder first layer (both passes)
        + D_SPK * h + 2 * h           # speaker term + pitch heads
        + h * c + c * 8 * c           # decoder second layer + x8 lane replication
    )
    bytes_accessed = (sum(int(a.size) * a.dtype.itemsize for a in args)
                      + sum(math.prod(s.shape) * 4 for s in out_shapes))

    kernel = functools.partial(_generator_kernel, mc=mc, tc=tc, c=c, h=h,
                               num_bins=NUM_BINS, nb_pad=NB_PAD)
    return pl.pallas_call(
        kernel,
        grid=(1,),
        in_specs=[_vspec(a.shape) for a in args],
        out_specs=[_vspec(s.shape) for s in out_shapes],
        out_shape=out_shapes,
        compiler_params=_COMPILER,
        cost_estimate=pl.CostEstimate(flops=int(flops), transcendentals=0,
                                      bytes_accessed=int(bytes_accessed)),
    )(*args)


# ------------------------------ glue (plain JAX) -----------------------------
def interp_lnr(mel, len_org):
    # TODO(synk): original InterpLnr performs *random* segment-wise linear
    # resampling (training-time augmentation, non-deterministic); identity here.
    del len_org
    return mel


def generator_forward(packed, mel_in, len_org, sp_id):
    bq, tq, cq = mel_in.shape
    tc = tq // 8
    mc = bq * tc

    mel_inter = interp_lnr(mel_in, len_org)
    del mel_inter  # TODO(synk): fused Er+Ec assumes InterpLnr == identity (same taps).

    # (B, T, C) -> (B*T/8, 8*C): free row-major reshape; the kernel gathers the
    # conv taps from this lane-packed layout, so no HBM im2col is materialized.
    mel_g = mel_in.reshape(mc, 8 * cq)
    # sp_id expanded only to code rate (tiny); the x8 repeat never hits HBM.
    sp_code = jnp.broadcast_to(sp_id[:, None, :],
                               (bq, tc, sp_id.shape[-1])).reshape(mc, -1)

    mel128, oh1, oh2, codes1, codes2 = fused_generator(mel_g, sp_code, packed, tc=tc)

    # Lane-dense kernel outputs -> module-contract shapes (free reshapes + one slice).
    mel_output = mel128.reshape(bq, tq, cq)
    pitch_p_repeat_quan = oh1.reshape(bq, tq, NB_PAD)[..., :NB1]
    pitch_p_r_quan = oh2.reshape(bq, tq, NB_PAD)[..., :NB1]
    c1 = codes1.reshape(bq, tc, DRC)
    c2 = codes2.reshape(bq, tc, DRC)
    return (mel_output, pitch_p_repeat_quan,
            c1[..., :D_R], c1[..., D_R:],
            c2[..., :D_R], c2[..., D_R:],
            pitch_p_r_quan)


# ------------------------------ parameters -----------------------------------
def _init_linear(key, fan_in, fan_out):
    kw, kb = jax.random.split(key)
    scale = 1.0 / jnp.sqrt(jnp.float32(fan_in))
    w = jax.random.uniform(kw, (fan_in, fan_out), jnp.float32, -scale, scale)
    b = jax.random.uniform(kb, (1, fan_out), jnp.float32, -scale, scale)
    return w, b


def init_params(key):
    ks = jax.random.split(key, 8)
    er_w1, er_b1 = _init_linear(ks[0], KSIZE * N_MEL, D_HID)
    er_w2, er_b2 = _init_linear(ks[1], D_HID, D_R)
    ec_w1, ec_b1 = _init_linear(ks[2], KSIZE * N_MEL, D_HID)
    ec_w2, ec_b2 = _init_linear(ks[3], D_HID, D_C)
    p_w1, p_b1 = _init_linear(ks[4], D_R + D_C + D_SPK, D_HID)
    p_w2, p_b2 = _init_linear(ks[5], D_HID, 1)
    ds_w1, ds_b1 = _init_linear(ks[6], D_R + D_C + 1, D_HID)
    ds_w2, ds_b2 = _init_linear(ks[7], D_HID, N_MEL)
    return {
        "Er": (er_w1, er_b1, er_w2, er_b2),
        "Ec": (ec_w1, ec_b1, ec_w2, ec_b2),
        "P": (p_w1, p_b1, p_w2, p_b2),
        "Ds": (ds_w1, ds_b1, ds_w2, ds_b2),
    }


def pack_params(p):
    """Pre-pack module weights into the fused-kernel layout (done once, outside jit)."""
    er_w1, er_b1, er_w2, er_b2 = p["Er"]
    ec_w1, ec_b1, ec_w2, ec_b2 = p["Ec"]
    c, h = N_MEL, D_HID
    # conv taps stacked along K (rows [0:C]=t-1, [C:2C]=t, [2C:3C]=t+1); Er|Ec along N.
    w1 = jnp.concatenate(
        [jnp.concatenate([er_w1[i * c:(i + 1) * c], ec_w1[i * c:(i + 1) * c]], axis=1)
         for i in range(KSIZE)], axis=0)                              # (3C, 2H)
    b1 = jnp.concatenate([er_b1, ec_b1], axis=1)                      # (1, 2H)
    w2 = jnp.zeros((2 * h, DRC), jnp.float32)                         # block diagonal
    w2 = w2.at[:h, :D_R].set(er_w2).at[h:, D_R:].set(ec_w2)
    b2 = jnp.concatenate([er_b2, ec_b2], axis=1)                      # (1, D_R+D_C)

    p_w1, p_b1, p_w2, p_b2 = p["P"]
    ds_w1, ds_b1, ds_w2, ds_b2 = p["Ds"]
    # pitch + decoder first-layer weights that multiply `codes`, packed along N.
    w_pd1 = jnp.concatenate([p_w1[:DRC], ds_w1[:DRC]], axis=1)        # (D_R+D_C, 2H)
    wp1_s = p_w1[DRC:]                                                # (D_SPK, H)
    wp2_row = p_w2.T                                                  # (1, H) — VPU head
    wd1_p = ds_w1[DRC:DRC + 1]                                        # (1, H)

    return {
        "enc": (w1, b1, w2, b2),
        "P": (w_pd1, wp1_s, p_b1, wp2_row, p_b2),
        "Ds": (wd1_p, ds_b1, ds_w2, ds_b2),
    }


# --------------------------------- main ---------------------------------------
if __name__ == "__main__":
    key = jax.random.PRNGKey(0)
    k_param, k_mel, k_spk = jax.random.split(key, 3)

    params = init_params(k_param)
    packed = pack_params(params)
    mel_in = jax.random.normal(k_mel, (B, T, N_MEL), jnp.float32)
    len_org = jnp.full((B,), T, dtype=jnp.int32)
    sp_id = jax.random.normal(k_spk, (B, D_SPK), jnp.float32)

    fwd = jax.jit(generator_forward)
    outs = jax.block_until_ready(fwd(packed, mel_in, len_org, sp_id))

    (mel_output, pitch_quan, rhythm, content,
     rhythm_r, content_r, pitch_r_quan) = outs
    assert mel_output.shape == (B, T, N_MEL)
    assert pitch_quan.shape == (B, T, NUM_BINS + 1)
    assert rhythm.shape == (B, T // 8, D_R)
    assert content.shape == (B, T // 8, D_C)
    assert rhythm_r.shape == (B, T // 8, D_R)
    assert content_r.shape == (B, T // 8, D_C)
    assert pitch_r_quan.shape == (B, T, NUM_BINS + 1)
    print("KERNEL_OK")
</pallas_src>

<mosaic_0001>
module attributes {stable_mosaic.version = 11 : i64} {
  func.func @_generator_kernel(%arg0: i32, %arg1: memref<4x128xf32, #tpu.memory_space<vmem>>, %arg2: memref<4x8xf32, #tpu.memory_space<vmem>>, %arg3: memref<48x64xf32, #tpu.memory_space<vmem>>, %arg4: memref<1x64xf32, #tpu.memory_space<vmem>>, %arg5: memref<64x12xf32, #tpu.memory_space<vmem>>, %arg6: memref<1x12xf32, #tpu.memory_space<vmem>>, %arg7: memref<12x64xf32, #tpu.memory_space<vmem>>, %arg8: memref<8x32xf32, #tpu.memory_space<vmem>>, %arg9: memref<1x32xf32, #tpu.memory_space<vmem>>, %arg10: memref<1x32xf32, #tpu.memory_space<vmem>>, %arg11: memref<1x1xf32, #tpu.memory_space<vmem>>, %arg12: memref<1x32xf32, #tpu.memory_space<vmem>>, %arg13: memref<1x32xf32, #tpu.memory_space<vmem>>, %arg14: memref<32x16xf32, #tpu.memory_space<vmem>>, %arg15: memref<1x16xf32, #tpu.memory_space<vmem>>, %arg16: memref<4x128xf32, #tpu.memory_space<vmem>>, %arg17: memref<4x8x384xf32, #tpu.memory_space<vmem>>, %arg18: memref<4x8x384xf32, #tpu.memory_space<vmem>>, %arg19: memref<4x12xf32, #tpu.memory_space<vmem>>, %arg20: memref<4x12xf32, #tpu.memory_space<vmem>>) attributes {dimension_semantics = [#tpu.dimension_semantics<arbitrary>], iteration_bounds = array<i64: 1>, scalar_prefetch = 0 : i64, scratch_operands = 0 : i64, tpu.core_type = #tpu.core_type<tc>, window_params = [{pipeline_mode = #tpu.pipeline_mode<synchronous>, transform_indices = @transform_0, window_bounds = array<i64: 4, 128>}, {pipeline_mode = #tpu.pipeline_mode<synchronous>, transform_indices = @transform_1, window_bounds = array<i64: 4, 8>}, {pipeline_mode = #tpu.pipeline_mode<synchronous>, transform_indices = @transform_2, window_bounds = array<i64: 48, 64>}, {pipeline_mode = #tpu.pipeline_mode<synchronous>, transform_indices = @transform_3, window_bounds = array<i64: 1, 64>}, {pipeline_mode = #tpu.pipeline_mode<synchronous>, transform_indices = @transform_4, window_bounds = array<i64: 64, 12>}, {pipeline_mode = #tpu.pipeline_mode<synchronous>, transform_indices = @transform_5, window_bounds = array<i64: 1, 12>}, {pipeline_mode = #tpu.pipeline_mode<synchronous>, transform_indices = @transform_6, window_bounds = array<i64: 12, 64>}, {pipeline_mode = #tpu.pipeline_mode<synchronous>, transform_indices = @transform_7, window_bounds = array<i64: 8, 32>}, {pipeline_mode = #tpu.pipeline_mode<synchronous>, transform_indices = @transform_8, window_bounds = array<i64: 1, 32>}, {pipeline_mode = #tpu.pipeline_mode<synchronous>, transform_indices = @transform_9, window_bounds = array<i64: 1, 32>}, {pipeline_mode = #tpu.pipeline_mode<synchronous>, transform_indices = @transform_10, window_bounds = array<i64: 1, 1>}, {pipeline_mode = #tpu.pipeline_mode<synchronous>, transform_indices = @transform_11, window_bounds = array<i64: 1, 32>}, {pipeline_mode = #tpu.pipeline_mode<synchronous>, transform_indices = @transform_12, window_bounds = array<i64: 1, 32>}, {pipeline_mode = #tpu.pipeline_mode<synchronous>, transform_indices = @transform_13, window_bounds = array<i64: 32, 16>}, {pipeline_mode = #tpu.pipeline_mode<synchronous>, transform_indices = @transform_14, window_bounds = array<i64: 1, 16>}, {pipeline_mode = #tpu.pipeline_mode<synchronous>, transform_indices = @transform_15, window_bounds = array<i64: 4, 128>}, {pipeline_mode = #tpu.pipeline_mode<synchronous>, transform_indices = @transform_16, window_bounds = array<i64: 4, 8, 384>}, {pipeline_mode = #tpu.pipeline_mode<synchronous>, transform_indices = @transform_17, window_bounds = array<i64: 4, 8, 384>}, {pipeline_mode = #tpu.pipeline_mode<synchronous>, transform_indices = @transform_18, window_bounds = array<i64: 4, 12>}, {pipeline_mode = #tpu.pipeline_mode<synchronous>, transform_indices = @transform_19, window_bounds = array<i64: 4, 12>}]} {
    %c0 = arith.constant 0 : index
    %c0_0 = arith.constant 0 : index
    %0 = vector.load %arg1[%c0, %c0_0] : memref<4x128xf32, #tpu.memory_space<vmem>>, vector<4x128xf32>
    %c0_1 = arith.constant 0 : index
    %c0_2 = arith.constant 0 : index
    %1 = vector.load %arg4[%c0_1, %c0_2] : memref<1x64xf32, #tpu.memory_space<vmem>>, vector<1x64xf32>
    %c0_3 = arith.constant 0 : index
    %c0_4 = arith.constant 0 : index
    %2 = vector.load %arg6[%c0_3, %c0_4] : memref<1x12xf32, #tpu.memory_space<vmem>>, vector<1x12xf32>
    %c0_5 = arith.constant 0 : index
    %c0_6 = arith.constant 0 : index
    %3 = vector.load %arg5[%c0_5, %c0_6] : memref<64x12xf32, #tpu.memory_space<vmem>>, vector<64x12xf32>
    %c0_7 = arith.constant 0 : index
    %c0_8 = arith.constant 0 : index
    %4 = vector.load %arg7[%c0_7, %c0_8] : memref<12x64xf32, #tpu.memory_space<vmem>>, vector<12x64xf32>
    %c0_9 = arith.constant 0 : index
    %c0_10 = arith.constant 0 : index
    %5 = vector.load %arg9[%c0_9, %c0_10] : memref<1x32xf32, #tpu.memory_space<vmem>>, vector<1x32xf32>
    %c0_11 = arith.constant 0 : index
    %c0_12 = arith.constant 0 : index
    %6 = vector.load %arg10[%c0_11, %c0_12] : memref<1x32xf32, #tpu.memory_space<vmem>>, vector<1x32xf32>
    %c0_13 = arith.constant 0 : index
    %c0_14 = arith.constant 0 : index
    %7 = vector.load %arg11[%c0_13, %c0_14] : memref<1x1xf32, #tpu.memory_space<vmem>>, vector<1x1xf32>
    %c0_15 = arith.constant 0 : index
    %c0_16 = arith.constant 0 : index
    %8 = vector.load %arg12[%c0_15, %c0_16] : memref<1x32xf32, #tpu.memory_space<vmem>>, vector<1x32xf32>
    %c0_17 = arith.constant 0 : index
    %c0_18 = arith.constant 0 : index
    %9 = vector.load %arg13[%c0_17, %c0_18] : memref<1x32xf32, #tpu.memory_space<vmem>>, vector<1x32xf32>
    %c0_19 = arith.constant 0 : index
    %c0_20 = arith.constant 0 : index
    %10 = vector.load %arg14[%c0_19, %c0_20] : memref<32x16xf32, #tpu.memory_space<vmem>>, vector<32x16xf32>
    %c0_21 = arith.constant 0 : index
    %c0_22 = arith.constant 0 : index
    %11 = vector.load %arg15[%c0_21, %c0_22] : memref<1x16xf32, #tpu.memory_space<vmem>>, vector<1x16xf32>
    %c0_23 = arith.constant 0 : index
    %c0_24 = arith.constant 0 : index
    %12 = vector.load %arg3[%c0_23, %c0_24] : memref<48x64xf32, #tpu.memory_space<vmem>>, vector<16x64xf32>
    %c16 = arith.constant 16 : index
    %c0_25 = arith.constant 0 : index
    %13 = vector.load %arg3[%c16, %c0_25] : memref<48x64xf32, #tpu.memory_space<vmem>>, vector<32x64xf32>
    %c16_26 = arith.constant 16 : index
    %c0_27 = arith.constant 0 : index
    %14 = vector.load %arg3[%c16_26, %c0_27] : memref<48x64xf32, #tpu.memory_space<vmem>>, vector<16x64xf32>
    %c32 = arith.constant 32 : index
    %c0_28 = arith.constant 0 : index
    %15 = vector.load %arg3[%c32, %c0_28] : memref<48x64xf32, #tpu.memory_space<vmem>>, vector<16x64xf32>
    %16 = arith.addf %14, %15 : vector<16x64xf32>
    %17 = tpu.iota {dimensions = array<i32: 0>} : vector<4x4xi32>
    %18 = tpu.iota {dimensions = array<i32: 1>} : vector<4x4xi32>
    %c1_i32 = arith.constant 1 : i32
    %19 = vector.broadcast %c1_i32 : i32 to vector<4x4xi32>
    %20 = arith.subi %17, %19 : vector<4x4xi32>
    %21 = arith.cmpi eq, %18, %20 : vector<4x4xi32>
    %c2_i32 = arith.constant 2 : i32
    %c0_i32 = arith.constant 0 : i32
    %22 = arith.cmpi eq, %c2_i32, %c0_i32 : i32
    %c1_i32_29 = arith.constant 1 : i32
    %23 = arith.select %22, %c1_i32_29, %c2_i32 : i32
    %24 = vector.broadcast %23 : i32 to vector<4x4xi32>
    %25 = arith.remsi %17, %24 : vector<4x4xi32>
    %c0_i32_30 = arith.constant 0 : i32
    %26 = vector.broadcast %c0_i32_30 : i32 to vector<4x4xi32>
    %27 = arith.cmpi ne, %25, %26 : vector<4x4xi32>
    %c0_i32_31 = arith.constant 0 : i32
    %28 = vector.broadcast %c0_i32_31 : i32 to vector<4x4xi32>
    %29 = arith.cmpi slt, %25, %28 : vector<4x4xi32>
    %c0_i32_32 = arith.constant 0 : i32
    %30 = arith.cmpi slt, %23, %c0_i32_32 : i32
    %31 = vector.broadcast %30 : i1 to vector<4x4xi1>
    %32 = vector.broadcast %31 : vector<4x4xi1> to vector<4x4xi1>
    %33 = arith.xori %29, %32 : vector<4x4xi1>
    %34 = arith.andi %33, %27 : vector<4x4xi1>
    %35 = vector.broadcast %23 : i32 to vector<4x4xi32>
    %36 = arith.addi %25, %35 : vector<4x4xi32>
    %37 = arith.select %34, %36, %25 : vector<4x4xi1>, vector<4x4xi32>
    %c0_i32_33 = arith.constant 0 : i32
    %38 = vector.broadcast %c0_i32_33 : i32 to vector<4x4xi32>
    %39 = arith.cmpi ne, %37, %38 : vector<4x4xi32>
    %40 = arith.andi %21, %39 : vector<4x4xi1>
    %cst = arith.constant 1.000000e+00 : f32
    %cst_34 = arith.constant 0.000000e+00 : f32
    %41 = vector.broadcast %cst : f32 to vector<4x4xf32>
    %42 = vector.broadcast %cst_34 : f32 to vector<4x4xf32>
    %43 = arith.select %40, %41, %42 : vector<4x4xi1>, vector<4x4xf32>
    %44 = tpu.iota {dimensions = array<i32: 0>} : vector<16x128xi32>
    %45 = tpu.iota {dimensions = array<i32: 1>} : vector<16x128xi32>
    %c16_i32 = arith.constant 16 : i32
    %c0_i32_35 = arith.constant 0 : i32
    %46 = arith.cmpi eq, %c16_i32, %c0_i32_35 : i32
    %c1_i32_36 = arith.constant 1 : i32
    %47 = arith.select %46, %c1_i32_36, %c16_i32 : i32
    %48 = vector.broadcast %47 : i32 to vector<16x128xi32>
    %49 = arith.remsi %45, %48 : vector<16x128xi32>
    %c0_i32_37 = arith.constant 0 : i32
    %50 = vector.broadcast %c0_i32_37 : i32 to vector<16x128xi32>
    %51 = arith.cmpi ne, %49, %50 : vector<16x128xi32>
    %c0_i32_38 = arith.constant 0 : i32
    %52 = vector.broadcast %c0_i32_38 : i32 to vector<16x128xi32>
    %53 = arith.cmpi slt, %49, %52 : vector<16x128xi32>
    %c0_i32_39 = arith.constant 0 : i32
    %54 = arith.cmpi slt, %47, %c0_i32_39 : i32
    %55 = vector.broadcast %54 : i1 to vector<16x128xi1>
    %56 = vector.broadcast %55 : vector<16x128xi1> to vector<16x128xi1>
    %57 = arith.xori %53, %56 : vector<16x128xi1>
    %58 = arith.andi %57, %51 : vector<16x128xi1>
    %59 = vector.broadcast %47 : i32 to vector<16x128xi32>
    %60 = arith.addi %49, %59 : vector<16x128xi32>
    %61 = arith.select %58, %60, %49 : vector<16x128xi1>, vector<16x128xi32>
    %62 = arith.cmpi eq, %61, %44 : vector<16x128xi32>
    %cst_40 = arith.constant 1.000000e+00 : f32
    %cst_41 = arith.constant 0.000000e+00 : f32
    %63 = vector.broadcast %cst_40 : f32 to vector<16x128xf32>
    %64 = vector.broadcast %cst_41 : f32 to vector<16x128xf32>
    %65 = arith.select %62, %63, %64 : vector<16x128xi1>, vector<16x128xf32>
    %c0_42 = arith.constant 0 : index
    %c0_43 = arith.constant 0 : index
    %66 = vector.load %arg2[%c0_42, %c0_43] : memref<4x8xf32, #tpu.memory_space<vmem>>, vector<4x8xf32>
    %c0_44 = arith.constant 0 : index
    %c0_45 = arith.constant 0 : index
    %67 = vector.load %arg8[%c0_44, %c0_45] : memref<8x32xf32, #tpu.memory_space<vmem>>, vector<8x32xf32>
    %cst_46 = arith.constant dense<0.000000e+00> : vector<4x32xf32>
    %68 = tpu.matmul %66, %67, %cst_46 {dimension_numbers = #tpu.dot_dimension_numbers<[1], [0], [0], [1], [0, 0, 1, 1], [], []>} : vector<4x8xf32>, vector<8x32xf32>, vector<4x32xf32> -> vector<4x32xf32>
    %69 = tpu.iota {dimensions = array<i32: 1>} : vector<4x384xi32>
    %70 = vector.extract_strided_slice %0 {offsets = [0, 112], sizes = [4, 16], strides = [1, 1]} : vector<4x128xf32> to vector<4x16xf32>
    %cst_47 = arith.constant dense<0.000000e+00> : vector<4x16xf32>
    %71 = tpu.matmul %43, %70, %cst_47 {dimension_numbers = #tpu.dot_dimension_numbers<[1], [0], [0], [1], [0, 0, 1, 1], [], []>} : vector<4x4xf32>, vector<4x16xf32>, vector<4x16xf32> -> vector<4x16xf32>
    %72 = vector.extract_strided_slice %0 {offsets = [0, 0], sizes = [4, 32], strides = [1, 1]} : vector<4x128xf32> to vector<4x32xf32>
    %cst_48 = arith.constant dense<0.000000e+00> : vector<4x64xf32>
    %73 = tpu.matmul %71, %12, %cst_48 {dimension_numbers = #tpu.dot_dimension_numbers<[1], [0], [0], [1], [0, 0, 1, 1], [], []>} : vector<4x16xf32>, vector<16x64xf32>, vector<4x64xf32> -> vector<4x64xf32>
    %cst_49 = arith.constant dense<0.000000e+00> : vector<4x64xf32>
    %74 = tpu.matmul %72, %13, %cst_49 {dimension_numbers = #tpu.dot_dimension_numbers<[1], [0], [0], [1], [0, 0, 1, 1], [], []>} : vector<4x32xf32>, vector<32x64xf32>, vector<4x64xf32> -> vector<4x64xf32>
    %75 = arith.addf %73, %74 : vector<4x64xf32>
    %76 = vector.broadcast %1 : vector<1x64xf32> to vector<4x64xf32>
    %77 = arith.addf %75, %76 : vector<4x64xf32>
    %cst_50 = arith.constant 0.000000e+00 : f32
    %78 = vector.broadcast %cst_50 : f32 to vector<4x64xf32>
    %79 = arith.maximumf %77, %78 : vector<4x64xf32>
    %cst_51 = arith.constant dense<0.000000e+00> : vector<4x12xf32>
    %80 = tpu.matmul %79, %3, %cst_51 {dimension_numbers = #tpu.dot_dimension_numbers<[1], [0], [0], [1], [0, 0, 1, 1], [], []>} : vector<4x64xf32>, vector<64x12xf32>, vector<4x12xf32> -> vector<4x12xf32>
    %81 = vector.broadcast %2 : vector<1x12xf32> to vector<4x12xf32>
    %82 = arith.addf %80, %81 : vector<4x12xf32>
    %c0_52 = arith.constant 0 : index
    %c0_53 = arith.constant 0 : index
    %83 = vector.load %arg19[%c0_52, %c0_53] : memref<4x12xf32, #tpu.memory_space<vmem>>, vector<4x12xf32>
    tpu.vector_store %arg19[%c0_52, %c0_53], %82 {strides = array<i32>} : memref<4x12xf32, #tpu.memory_space<vmem>>, vector<4x12xf32>,
    %cst_54 = arith.constant dense<0.000000e+00> : vector<4x64xf32>
    %84 = tpu.matmul %82, %4, %cst_54 {dimension_numbers = #tpu.dot_dimension_numbers<[1], [0], [0], [1], [0, 0, 1, 1], [], []>} : vector<4x12xf32>, vector<12x64xf32>, vector<4x64xf32> -> vector<4x64xf32>
    %85 = vector.extract_strided_slice %84 {offsets = [0, 0], sizes = [4, 32], strides = [1, 1]} : vector<4x64xf32> to vector<4x32xf32>
    %86 = arith.addf %85, %68 : vector<4x32xf32>
    %87 = vector.broadcast %5 : vector<1x32xf32> to vector<4x32xf32>
    %88 = arith.addf %86, %87 : vector<4x32xf32>
    %cst_55 = arith.constant 0.000000e+00 : f32
    %89 = vector.broadcast %cst_55 : f32 to vector<4x32xf32>
    %90 = arith.maximumf %88, %89 : vector<4x32xf32>
    %91 = vector.broadcast %6 : vector<1x32xf32> to vector<4x32xf32>
    %92 = arith.mulf %90, %91 : vector<4x32xf32>
    %cst_56 = arith.constant dense<0.000000e+00> : vector<4xf32>
    %93 = vector.multi_reduction <add>, %92, %cst_56 [1] : vector<4x32xf32> to vector<4xf32>
    %94 = vector.shape_cast %93 : vector<4xf32> to vector<4x1xf32>
    %95 = vector.broadcast %7 : vector<1x1xf32> to vector<4x1xf32>
    %96 = arith.addf %94, %95 : vector<4x1xf32>
    %cst_57 = arith.constant 0.000000e+00 : f32
    %97 = vector.broadcast %cst_57 : f32 to vector<4x1xf32>
    %98 = arith.cmpf ole, %96, %97 : vector<4x1xf32>
    %cst_58 = arith.constant 0.000000e+00 : f32
    %99 = vector.broadcast %cst_58 : f32 to vector<4x1xf32>
    %100 = arith.select %98, %99, %96 : vector<4x1xi1>, vector<4x1xf32>
    %cst_59 = arith.constant 0.000000e+00 : f32
    %cst_60 = arith.constant 1.000000e+00 : f32
    %101 = vector.broadcast %cst_59 : f32 to vector<4x1xf32>
    %102 = arith.maximumf %101, %100 : vector<4x1xf32>
    %103 = vector.broadcast %cst_60 : f32 to vector<4x1xf32>
    %104 = arith.minimumf %103, %102 : vector<4x1xf32>
    %cst_61 = arith.constant 2.550000e+02 : f32
    %105 = vector.broadcast %cst_61 : f32 to vector<4x1xf32>
    %106 = arith.mulf %104, %105 : vector<4x1xf32>
    %107 = math.roundeven %106 : vector<4x1xf32>
    %cst_62 = arith.constant 1.000000e+00 : f32
    %108 = vector.broadcast %cst_62 : f32 to vector<4x1xf32>
    %109 = arith.addf %107, %108 : vector<4x1xf32>
    %cst_63 = arith.constant 0.000000e+00 : f32
    %110 = vector.broadcast %cst_63 : f32 to vector<4x1xf32>
    %111 = arith.select %98, %110, %109 : vector<4x1xi1>, vector<4x1xf32>
    %112 = arith.fptosi %111 : vector<4x1xf32> to vector<4x1xi32>
    %113 = vector.broadcast %112 : vector<4x1xi32> to vector<4x384xi32>
    %114 = arith.cmpi eq, %69, %113 : vector<4x384xi32>
    %115 = arith.extui %114 : vector<4x384xi1> to vector<4x384xi32>
    %116 = arith.sitofp %115 : vector<4x384xi32> to vector<4x384xf32>
    %117 = vector.shape_cast %116 : vector<4x384xf32> to vector<4x1x384xf32>
    %118 = vector.shape_cast %117 : vector<4x1x384xf32> to vector<4x1x384xf32>
    %119 = vector.broadcast %118 : vector<4x1x384xf32> to vector<4x8x384xf32>
    %c0_64 = arith.constant 0 : index
    %c0_65 = arith.constant 0 : index
    %c0_66 = arith.constant 0 : index
    %120 = vector.load %arg17[%c0_64, %c0_65, %c0_66] : memref<4x8x384xf32, #tpu.memory_space<vmem>>, vector<4x8x384xf32>
    tpu.vector_store %arg17[%c0_64, %c0_65, %c0_66], %119 {strides = array<i32>} : memref<4x8x384xf32, #tpu.memory_space<vmem>>, vector<4x8x384xf32>,
    %121 = vector.extract_strided_slice %84 {offsets = [0, 32], sizes = [4, 32], strides = [1, 1]} : vector<4x64xf32> to vector<4x32xf32>
    %122 = vector.broadcast %96 : vector<4x1xf32> to vector<4x32xf32>
    %123 = vector.broadcast %8 : vector<1x32xf32> to vector<4x32xf32>
    %124 = arith.mulf %122, %123 : vector<4x32xf32>
    %125 = arith.addf %121, %124 : vector<4x32xf32>
    %126 = vector.broadcast %9 : vector<1x32xf32> to vector<4x32xf32>
    %127 = arith.addf %125, %126 : vector<4x32xf32>
    %cst_67 = arith.constant 0.000000e+00 : f32
    %128 = vector.broadcast %cst_67 : f32 to vector<4x32xf32>
    %129 = arith.maximumf %127, %128 : vector<4x32xf32>
    %cst_68 = arith.constant dense<0.000000e+00> : vector<4x16xf32>
    %130 = tpu.matmul %129, %10, %cst_68 {dimension_numbers = #tpu.dot_dimension_numbers<[1], [0], [0], [1], [0, 0, 1, 1], [], []>} : vector<4x32xf32>, vector<32x16xf32>, vector<4x16xf32> -> vector<4x16xf32>
    %131 = vector.broadcast %11 : vector<1x16xf32> to vector<4x16xf32>
    %132 = arith.addf %130, %131 : vector<4x16xf32>
    %cst_69 = arith.constant dense<0.000000e+00> : vector<4x128xf32>
    %133 = tpu.matmul %132, %65, %cst_69 {dimension_numbers = #tpu.dot_dimension_numbers<[1], [0], [0], [1], [0, 0, 1, 1], [], []>} : vector<4x16xf32>, vector<16x128xf32>, vector<4x128xf32> -> vector<4x128xf32>
    %c0_70 = arith.constant 0 : index
    %c0_71 = arith.constant 0 : index
    %134 = vector.load %arg16[%c0_70, %c0_71] : memref<4x128xf32, #tpu.memory_space<vmem>>, vector<4x128xf32>
    tpu.vector_store %arg16[%c0_70, %c0_71], %133 {strides = array<i32>} : memref<4x128xf32, #tpu.memory_space<vmem>>, vector<4x128xf32>,
    %cst_72 = arith.constant dense<0.000000e+00> : vector<4x16xf32>
    %135 = tpu.matmul %43, %132, %cst_72 {dimension_numbers = #tpu.dot_dimension_numbers<[1], [0], [0], [1], [0, 0, 1, 1], [], []>} : vector<4x4xf32>, vector<4x16xf32>, vector<4x16xf32> -> vector<4x16xf32>
    %cst_73 = arith.constant dense<0.000000e+00> : vector<4x64xf32>
    %136 = tpu.matmul %135, %12, %cst_73 {dimension_numbers = #tpu.dot_dimension_numbers<[1], [0], [0], [1], [0, 0, 1, 1], [], []>} : vector<4x16xf32>, vector<16x64xf32>, vector<4x64xf32> -> vector<4x64xf32>
    %cst_74 = arith.constant dense<0.000000e+00> : vector<4x64xf32>
    %137 = tpu.matmul %132, %16, %cst_74 {dimension_numbers = #tpu.dot_dimension_numbers<[1], [0], [0], [1], [0, 0, 1, 1], [], []>} : vector<4x16xf32>, vector<16x64xf32>, vector<4x64xf32> -> vector<4x64xf32>
    %138 = arith.addf %136, %137 : vector<4x64xf32>
    %139 = vector.broadcast %1 : vector<1x64xf32> to vector<4x64xf32>
    %140 = arith.addf %138, %139 : vector<4x64xf32>
    %cst_75 = arith.constant 0.000000e+00 : f32
    %141 = vector.broadcast %cst_75 : f32 to vector<4x64xf32>
    %142 = arith.maximumf %140, %141 : vector<4x64xf32>
    %cst_76 = arith.constant dense<0.000000e+00> : vector<4x12xf32>
    %143 = tpu.matmul %142, %3, %cst_76 {dimension_numbers = #tpu.dot_dimension_numbers<[1], [0], [0], [1], [0, 0, 1, 1], [], []>} : vector<4x64xf32>, vector<64x12xf32>, vector<4x12xf32> -> vector<4x12xf32>
    %144 = vector.broadcast %2 : vector<1x12xf32> to vector<4x12xf32>
    %145 = arith.addf %143, %144 : vector<4x12xf32>
    %c0_77 = arith.constant 0 : index
    %c0_78 = arith.constant 0 : index
    %146 = vector.load %arg20[%c0_77, %c0_78] : memref<4x12xf32, #tpu.memory_space<vmem>>, vector<4x12xf32>
    tpu.vector_store %arg20[%c0_77, %c0_78], %145 {strides = array<i32>} : memref<4x12xf32, #tpu.memory_space<vmem>>, vector<4x12xf32>,
    %cst_79 = arith.constant dense<0.000000e+00> : vector<4x64xf32>
    %147 = tpu.matmul %145, %4, %cst_79 {dimension_numbers = #tpu.dot_dimension_numbers<[1], [0], [0], [1], [0, 0, 1, 1], [], []>} : vector<4x12xf32>, vector<12x64xf32>, vector<4x64xf32> -> vector<4x64xf32>
    %148 = vector.extract_strided_slice %147 {offsets = [0, 0], sizes = [4, 32], strides = [1, 1]} : vector<4x64xf32> to vector<4x32xf32>
    %149 = arith.addf %148, %68 : vector<4x32xf32>
    %150 = vector.broadcast %5 : vector<1x32xf32> to vector<4x32xf32>
    %151 = arith.addf %149, %150 : vector<4x32xf32>
    %cst_80 = arith.constant 0.000000e+00 : f32
    %152 = vector.broadcast %cst_80 : f32 to vector<4x32xf32>
    %153 = arith.maximumf %151, %152 : vector<4x32xf32>
    %154 = vector.broadcast %6 : vector<1x32xf32> to vector<4x32xf32>
    %155 = arith.mulf %153, %154 : vector<4x32xf32>
    %cst_81 = arith.constant dense<0.000000e+00> : vector<4xf32>
    %156 = vector.multi_reduction <add>, %155, %cst_81 [1] : vector<4x32xf32> to vector<4xf32>
    %157 = vector.shape_cast %156 : vector<4xf32> to vector<4x1xf32>
    %158 = vector.broadcast %7 : vector<1x1xf32> to vector<4x1xf32>
    %159 = arith.addf %157, %158 : vector<4x1xf32>
    %cst_82 = arith.constant 0.000000e+00 : f32
    %160 = vector.broadcast %cst_82 : f32 to vector<4x1xf32>
    %161 = arith.cmpf ole, %159, %160 : vector<4x1xf32>
    %cst_83 = arith.constant 0.000000e+00 : f32
    %162 = vector.broadcast %cst_83 : f32 to vector<4x1xf32>
    %163 = arith.select %161, %162, %159 : vector<4x1xi1>, vector<4x1xf32>
    %cst_84 = arith.constant 0.000000e+00 : f32
    %cst_85 = arith.constant 1.000000e+00 : f32
    %164 = vector.broadcast %cst_84 : f32 to vector<4x1xf32>
    %165 = arith.maximumf %164, %163 : vector<4x1xf32>
    %166 = vector.broadcast %cst_85 : f32 to vector<4x1xf32>
    %167 = arith.minimumf %166, %165 : vector<4x1xf32>
    %cst_86 = arith.constant 2.550000e+02 : f32
    %168 = vector.broadcast %cst_86 : f32 to vector<4x1xf32>
    %169 = arith.mulf %167, %168 : vector<4x1xf32>
    %170 = math.roundeven %169 : vector<4x1xf32>
    %cst_87 = arith.constant 1.000000e+00 : f32
    %171 = vector.broadcast %cst_87 : f32 to vector<4x1xf32>
    %172 = arith.addf %170, %171 : vector<4x1xf32>
    %cst_88 = arith.constant 0.000000e+00 : f32
    %173 = vector.broadcast %cst_88 : f32 to vector<4x1xf32>
    %174 = arith.select %161, %173, %172 : vector<4x1xi1>, vector<4x1xf32>
    %175 = arith.fptosi %174 : vector<4x1xf32> to vector<4x1xi32>
    %176 = vector.broadcast %175 : vector<4x1xi32> to vector<4x384xi32>
    %177 = arith.cmpi eq, %69, %176 : vector<4x384xi32>
    %178 = arith.extui %177 : vector<4x384xi1> to vector<4x384xi32>
    %179 = arith.sitofp %178 : vector<4x384xi32> to vector<4x384xf32>
    %180 = vector.shape_cast %179 : vector<4x384xf32> to vector<4x1x384xf32>
    %181 = vector.shape_cast %180 : vector<4x1x384xf32> to vector<4x1x384xf32>
    %182 = vector.broadcast %181 : vector<4x1x384xf32> to vector<4x8x384xf32>
    %c0_89 = arith.constant 0 : index
    %c0_90 = arith.constant 0 : index
    %c0_91 = arith.constant 0 : index
    %183 = vector.load %arg18[%c0_89, %c0_90, %c0_91] : memref<4x8x384xf32, #tpu.memory_space<vmem>>, vector<4x8x384xf32>
    tpu.vector_store %arg18[%c0_89, %c0_90, %c0_91], %182 {strides = array<i32>} : memref<4x8x384xf32, #tpu.memory_space<vmem>>, vector<4x8x384xf32>,
    return
  }
  func.func @transform_0(%arg0: i32) -> (i32, i32) {
    %c0_i32 = arith.constant 0 : i32
    %c0_i32_0 = arith.constant 0 : i32
    %c0_i32_1 = arith.constant 0 : i32
    return %c0_i32, %c0_i32_0 : i32, i32
  }
  func.func @transform_1(%arg0: i32) -> (i32, i32) {
    %c0_i32 = arith.constant 0 : i32
    %c0_i32_0 = arith.constant 0 : i32
    %c0_i32_1 = arith.constant 0 : i32
    return %c0_i32, %c0_i32_0 : i32, i32
  }
  func.func @transform_2(%arg0: i32) -> (i32, i32) {
    %c0_i32 = arith.constant 0 : i32
    %c0_i32_0 = arith.constant 0 : i32
    %c0_i32_1 = arith.constant 0 : i32
    return %c0_i32, %c0_i32_0 : i32, i32
  }
  func.func @transform_3(%arg0: i32) -> (i32, i32) {
    %c0_i32 = arith.constant 0 : i32
    %c0_i32_0 = arith.constant 0 : i32
    %c0_i32_1 = arith.constant 0 : i32
    return %c0_i32, %c0_i32_0 : i32, i32
  }
  func.func @transform_4(%arg0: i32) -> (i32, i32) {
    %c0_i32 = arith.constant 0 : i32
    %c0_i32_0 = arith.constant 0 : i32
    %c0_i32_1 = arith.constant 0 : i32
    return %c0_i32, %c0_i32_0 : i32, i32
  }
  func.func @transform_5(%arg0: i32) -> (i32, i32) {
    %c0_i32 = arith.constant 0 : i32
    %c0_i32_0 = arith.constant 0 : i32
    %c0_i32_1 = arith.constant 0 : i32
    return %c0_i32, %c0_i32_0 : i32, i32
  }
  func.func @transform_6(%arg0: i32) -> (i32, i32) {
    %c0_i32 = arith.constant 0 : i32
    %c0_i32_0 = arith.constant 0 : i32
    %c0_i32_1 = arith.constant 0 : i32
    return %c0_i32, %c0_i32_0 : i32, i32
  }
  func.func @transform_7(%arg0: i32) -> (i32, i32) {
    %c0_i32 = arith.constant 0 : i32
    %c0_i32_0 = arith.constant 0 : i32
    %c0_i32_1 = arith.constant 0 : i32
    return %c0_i32, %c0_i32_0 : i32, i32
  }
  func.func @transform_8(%arg0: i32) -> (i32, i32) {
    %c0_i32 = arith.constant 0 : i32
    %c0_i32_0 = arith.constant 0 : i32
    %c0_i32_1 = arith.constant 0 : i32
    return %c0_i32, %c0_i32_0 : i32, i32
  }
  func.func @transform_9(%arg0: i32) -> (i32, i32) {
    %c0_i32 = arith.constant 0 : i32
    %c0_i32_0 = arith.constant 0 : i32
    %c0_i32_1 = arith.constant 0 : i32
    return %c0_i32, %c0_i32_0 : i32, i32
  }
  func.func @transform_10(%arg0: i32) -> (i32, i32) {
    %c0_i32 = arith.constant 0 : i32
    %c0_i32_0 = arith.constant 0 : i32
    %c0_i32_1 = arith.constant 0 : i32
    return %c0_i32, %c0_i32_0 : i32, i32
  }
  func.func @transform_11(%arg0: i32) -> (i32, i32) {
    %c0_i32 = arith.constant 0 : i32
    %c0_i32_0 = arith.constant 0 : i32
    %c0_i32_1 = arith.constant 0 : i32
    return %c0_i32, %c0_i32_0 : i32, i32
  }
  func.func @transform_12(%arg0: i32) -> (i32, i32) {
    %c0_i32 = arith.constant 0 : i32
    %c0_i32_0 = arith.constant 0 : i32
    %c0_i32_1 = arith.constant 0 : i32
    return %c0_i32, %c0_i32_0 : i32, i32
  }
  func.func @transform_13(%arg0: i32) -> (i32, i32) {
    %c0_i32 = arith.constant 0 : i32
    %c0_i32_0 = arith.constant 0 : i32
    %c0_i32_1 = arith.constant 0 : i32
    return %c0_i32, %c0_i32_0 : i32, i32
  }
  func.func @transform_14(%arg0: i32) -> (i32, i32) {
    %c0_i32 = arith.constant 0 : i32
    %c0_i32_0 = arith.constant 0 : i32
    %c0_i32_1 = arith.constant 0 : i32
    return %c0_i32, %c0_i32_0 : i32, i32
  }
  func.func @transform_15(%arg0: i32) -> (i32, i32) {
    %c0_i32 = arith.constant 0 : i32
    %c0_i32_0 = arith.constant 0 : i32
    %c0_i32_1 = arith.constant 0 : i32
    return %c0_i32, %c0_i32_0 : i32, i32
  }
  func.func @transform_16(%arg0: i32) -> (i32, i32, i32) {
    %c0_i32 = arith.constant 0 : i32
    %c0_i32_0 = arith.constant 0 : i32
    %c0_i32_1 = arith.constant 0 : i32
    %c0_i32_2 = arith.constant 0 : i32
    return %c0_i32, %c0_i32_0, %c0_i32_1 : i32, i32, i32
  }
  func.func @transform_17(%arg0: i32) -> (i32, i32, i32) {
    %c0_i32 = arith.constant 0 : i32
    %c0_i32_0 = arith.constant 0 : i32
    %c0_i32_1 = arith.constant 0 : i32
    %c0_i32_2 = arith.constant 0 : i32
    return %c0_i32, %c0_i32_0, %c0_i32_1 : i32, i32, i32
  }
  func.func @transform_18(%arg0: i32) -> (i32, i32) {
    %c0_i32 = arith.constant 0 : i32
    %c0_i32_0 = arith.constant 0 : i32
    %c0_i32_1 = arith.constant 0 : i32
    return %c0_i32, %c0_i32_0 : i32, i32
  }
  func.func @transform_19(%arg0: i32) -> (i32, i32) {
    %c0_i32 = arith.constant 0 : i32
    %c0_i32_0 = arith.constant 0 : i32
    %c0_i32_1 = arith.constant 0 : i32
    return %c0_i32, %c0_i32_0 : i32, i32
  }
}

</mosaic_0001>

<llo_original>
// kernel: generator_forward.1
$region0: #{generator_forward.1}
  #allocation0 [shape = 'u32[]', space=smem, size = 0x4, offset = 0x4, fixed_abs, tag = 'smem constant byte address 0x4 - core index']
  #allocation1 [shape = 'u32[144,128]{1,0:T(1,128)}', space=vmem, size = 0x12000, scoped, tag = 'internal scratch']
  #allocation2 [shape = 'f32[1,1]{1,0:T(1,128)S(1)}', space=vmem, size = 0x200, scoped, tag = 'scoped memory for generator_forward.1']
  %s0 = inlined_call_operand.vmem [shape: f32[4,128], index: 0, kind: input, shape index: {}]
  %s1 = inlined_call_operand.vmem [shape: f32[4,8], index: 1, kind: input, shape index: {}]
  %s2 = inlined_call_operand.vmem [shape: f32[48,64], index: 2, kind: input, shape index: {}]
  %s3 = inlined_call_operand.vmem [shape: f32[1,64], index: 3, kind: input, shape index: {}]
  %s4 = inlined_call_operand.vmem [shape: f32[64,12], index: 4, kind: input, shape index: {}]
  %s5 = inlined_call_operand.vmem [shape: f32[1,12], index: 5, kind: input, shape index: {}]
  %s6 = inlined_call_operand.vmem [shape: f32[12,64], index: 6, kind: input, shape index: {}]
  %s7 = inlined_call_operand.vmem [shape: f32[8,32], index: 7, kind: input, shape index: {}]
  %s8 = inlined_call_operand.vmem [shape: f32[1,32], index: 8, kind: input, shape index: {}]
  %s9 = inlined_call_operand.vmem [shape: f32[1,32], index: 9, kind: input, shape index: {}]
  %s10 = inlined_call_operand.<no memory space> [shape: f32[1,1], index: 10, kind: input, shape index: {}]
  %s11 = inlined_call_operand.vmem [shape: f32[1,32], index: 11, kind: input, shape index: {}]
  %s12 = inlined_call_operand.vmem [shape: f32[1,32], index: 12, kind: input, shape index: {}]
  %s13 = inlined_call_operand.vmem [shape: f32[32,16], index: 13, kind: input, shape index: {}]
  %s14 = inlined_call_operand.vmem [shape: f32[1,16], index: 14, kind: input, shape index: {}]
  %s15 = inlined_call_operand.vmem [shape: f32[4,128], index: 15, kind: output, shape index: {0}]
  %s16 = inlined_call_operand.hbm [shape: f32[4,8,384], index: 16, kind: output, shape index: {1}]
  %s17 = inlined_call_operand.hbm [shape: f32[4,8,384], index: 17, kind: output, shape index: {2}]
  %s18 = inlined_call_operand.vmem [shape: f32[4,12], index: 18, kind: output, shape index: {3}]
  %s19 = inlined_call_operand.vmem [shape: f32[4,12], index: 19, kind: output, shape index: {4}]
  %20 = xla_tuple %s15, %s16, %s17, %s18, %s19
  %s21 = sld [smem:[#allocation0]]
  $region102: #{generator_forward.1} parent=0
    _
  %s23 = ssub.s32 1, %s21
  %s24 = scalar_select 0, %s23, %s21
  %v25 = vstv %s10
  %26 = vst [vmem:[#allocation2] sm:$0x1] %v25
  $region1: #{generator_forward.1} parent=0
    #allocation3 [shape = 'u8[49152]{0}', space=vmem, size = 0xc000, scoped, tag = 'output window, operand 1, single buffered']
    #allocation4 [shape = 's32[1]{0}', space=sflag, size = 0x4, scoped, tag = 'scoped memory for generator_forward.1']
    #allocation5 [shape = 'u8[49152]{0}', space=vmem, size = 0xc000, scoped, tag = 'output window, operand 2, single buffered']
    #allocation6 [shape = 's32[1]{0}', space=sflag, size = 0x4, scoped, tag = 'scoped memory for generator_forward.1']
    %27 = vsyncpa [#allocation4], 0
    %28 = vsyncpa [#allocation6], 0
    // Predicated region
    $region2: #{generator_forward.1} parent=1 // pred_check
      _
    $region3: #{generator_forward.1} parent=1 // pred_check_branch
      %30 = sbr.rel (0) target = $region5
    $region4: #{generator_forward.1} parent=1 // pred_region
      _
    $region5: #{generator_forward.1} parent=1 // pred_fallthru
      _
    // Predicated region
    $region6: #{generator_forward.1} parent=1 // pred_check
      _
    $region7: #{generator_forward.1} parent=1 // pred_check_branch
      %32 = sbr.rel (0) target = $region9
    $region8: #{generator_forward.1} parent=1 // pred_region
      _
    $region9: #{generator_forward.1} parent=1 // pred_fallthru
      _
    // Predicated region
    $region10: #{generator_forward.1} parent=1 // pred_check
      _
    $region11: #{generator_forward.1} parent=1 // pred_check_branch
      %34 = sbr.rel (0) target = $region13
    $region12: #{generator_forward.1} parent=1 // pred_region
      _
    $region13: #{generator_forward.1} parent=1 // pred_fallthru
      _
    // Predicated region
    $region14: #{generator_forward.1} parent=1 // pred_check
      _
    $region15: #{generator_forward.1} parent=1 // pred_check_branch
      %36 = sbr.rel (0) target = $region17
    $region16: #{generator_forward.1} parent=1 // pred_region
      _
    $region17: #{generator_forward.1} parent=1 // pred_fallthru
      _
    // Predicated region
    $region18: #{generator_forward.1} parent=1 // pred_check
      _
    $region19: #{generator_forward.1} parent=1 // pred_check_branch
      %38 = sbr.rel (0) target = $region21
    $region20: #{generator_forward.1} parent=1 // pred_region
      _
    $region21: #{generator_forward.1} parent=1 // pred_fallthru
      _
    // Predicated region
    $region22: #{generator_forward.1} parent=1 // pred_check
      _
    $region23: #{generator_forward.1} parent=1 // pred_check_branch
      %40 = sbr.rel (0) target = $region25
    $region24: #{generator_forward.1} parent=1 // pred_region
      _
    $region25: #{generator_forward.1} parent=1 // pred_fallthru
      _
    // Predicated region
    $region26: #{generator_forward.1} parent=1 // pred_check
      _
    $region27: #{generator_forward.1} parent=1 // pred_check_branch
      %42 = sbr.rel (0) target = $region29
    $region28: #{generator_forward.1} parent=1 // pred_region
      _
    $region29: #{generator_forward.1} parent=1 // pred_fallthru
      _
    // Predicated region
    $region30: #{generator_forward.1} parent=1 // pred_check
      _
    $region31: #{generator_forward.1} parent=1 // pred_check_branch
      %44 = sbr.rel (0) target = $region33
    $region32: #{generator_forward.1} parent=1 // pred_region
      _
    $region33: #{generator_forward.1} parent=1 // pred_fallthru
      _
    // Predicated region
    $region34: #{generator_forward.1} parent=1 // pred_check
      _
    $region35: #{generator_forward.1} parent=1 // pred_check_branch
      %46 = sbr.rel (0) target = $region37
    $region36: #{generator_forward.1} parent=1 // pred_region
      _
    $region37: #{generator_forward.1} parent=1 // pred_fallthru
      _
    // Predicated region
    $region38: #{generator_forward.1} parent=1 // pred_check
      _
    $region39: #{generator_forward.1} parent=1 // pred_check_branch
      %48 = sbr.rel (0) target = $region41
    $region40: #{generator_forward.1} parent=1 // pred_region
      _
    $region41: #{generator_forward.1} parent=1 // pred_fallthru
      _
    // Predicated region
    $region42: #{generator_forward.1} parent=1 // pred_check
      _
    $region43: #{generator_forward.1} parent=1 // pred_check_branch
      %50 = sbr.rel (0) target = $region45
    $region44: #{generator_forward.1} parent=1 // pred_region
      _
    $region45: #{generator_forward.1} parent=1 // pred_fallthru
      _
    // Predicated region
    $region46: #{generator_forward.1} parent=1 // pred_check
      _
    $region47: #{generator_forward.1} parent=1 // pred_check_branch
      %52 = sbr.rel (0) target = $region49
    $region48: #{generator_forward.1} parent=1 // pred_region
      _
    $region49: #{generator_forward.1} parent=1 // pred_fallthru
      _
    // Predicated region
    $region50: #{generator_forward.1} parent=1 // pred_check
      _
    $region51: #{generator_forward.1} parent=1 // pred_check_branch
      %54 = sbr.rel (0) target = $region53
    $region52: #{generator_forward.1} parent=1 // pred_region
      _
    $region53: #{generator_forward.1} parent=1 // pred_fallthru
      _
    // Predicated region
    $region54: #{generator_forward.1} parent=1 // pred_check
      _
    $region55: #{generator_forward.1} parent=1 // pred_check_branch
      %56 = sbr.rel (0) target = $region57
    $region56: #{generator_forward.1} parent=1 // pred_region
      _
    $region57: #{generator_forward.1} parent=1 // pred_fallthru
      _
    // Predicated region
    $region58: #{generator_forward.1} parent=1 // pred_check
      _
    $region59: #{generator_forward.1} parent=1 // pred_check_branch
      %58 = sbr.rel (0) target = $region61
    $region60: #{generator_forward.1} parent=1 // pred_region
      _
    $region61: #{generator_forward.1} parent=1 // pred_fallthru
      _
    %v59 = vld [vmem:[%s0] sm:$0xf]
    %v60 = vld [vmem:[%s3] sm:$0x1]
    %v61 = vld [vmem:[%s5] sm:$0x1]
    %v62 = vld [vmem:[%s4] sm:$0xff]
    %v63 = vld [vmem:[%s4 + $0x8] sm:$0xff]
    %v64 = vld [vmem:[%s4 + $0x10] sm:$0xff]
    %v65 = vld [vmem:[%s4 + $0x18] sm:$0xff]
    %v66 = vld [vmem:[%s4 + $0x20] sm:$0xff]
    %v67 = vld [vmem:[%s4 + $0x28] sm:$0xff]
    %v68 = vld [vmem:[%s4 + $0x30] sm:$0xff]
    %v69 = vld [vmem:[%s4 + $0x38] sm:$0xff]
    %v70 = vld [vmem:[%s6] sm:$0xff]
    %v71 = vld [vmem:[%s6 + $0x8] sm:$0xf]
    %v72 = vld [vmem:[%s8] sm:$0x1]
    %v73 = vld [vmem:[%s9] sm:$0x1]
    %v74 = vld [vmem:[#allocation2] sm:$0x1]
    %v75 = vld [vmem:[%s11] sm:$0x1]
    %v76 = vld [vmem:[%s12] sm:$0x1]
    %v77 = vld [vmem:[%s13] sm:$0xff]
    %v78 = vld [vmem:[%s13 + $0x8] sm:$0xff]
    %v79 = vld [vmem:[%s13 + $0x10] sm:$0xff]
    %v80 = vld [vmem:[%s13 + $0x18] sm:$0xff]
    %v81 = vld [vmem:[%s14] sm:$0x1]
    %v82 = vld [vmem:[%s2] sm:$0xff]
    %v83 = vld [vmem:[%s2 + $0x8] sm:$0xff]
    %v84 = vld [vmem:[%s2 + $0x10] sm:$0xff]
    %v85 = vld [vmem:[%s2 + $0x18] sm:$0xff]
    %v86 = vld [vmem:[%s2 + $0x20] sm:$0xff]
    %v87 = vld [vmem:[%s2 + $0x28] sm:$0xff]
    %v88 = vadd.f32 %v84, %v86
    %v89 = vadd.f32 %v85, %v87
    %v90 = vlaneseq
    %v91 = vshrl.u32 %v90, 7
    %v92 = vlaneseq
    %v93 = vand.u32 %v92, 127
    %v94 = vsub.s32 %v91, 1
    %vm95 = vcmp.eq.s32.totalorder %v93, %v94
    %vm96 = vcmp.lt.s32.totalorder %v91, 0
    %v97 = vsub.s32 0, %v91
    %v98 = vsel %vm96, %v97, %v91
    %v99 = vshrl.u32 %v98, 1
    %v100 = vand.u32 %v98, 1
    %v101 = vsub.s32 0, %v100
    %v102 = vsel %vm96, %v101, %v100
    %vm103 = vcmp.ne.s32.totalorder %v102, 0
    %vm104 = vcmp.lt.s32.totalorder %v102, 0
    %vm105 = vmand %vm104, %vm103
    %v106 = vadd.s32 %v102, 2
    %v107 = vsel %vm105, %v106, %v102
    %vm108 = vcmp.ne.s32.totalorder %v107, 0
    %vm109 = vmand %vm95, %vm108
    %v110 = vsel %vm109, 1.0, 0.0
    %v111 = vadd.s32 %v91, 8
    %vm112 = vcmp.lt.s32.totalorder %v93, 0
    %v113 = vsub.s32 0, %v93
    %v114 = vsel %vm112, %v113, %v93
    %v115 = vshrl.u32 %v114, 4
    %v116 = vand.u32 %v114, 15
    %v117 = vsub.s32 0, %v116
    %v118 = vsel %vm112, %v117, %v116
    %vm119 = vcmp.ne.s32.totalorder %v118, 0
    %vm120 = vcmp.lt.s32.totalorder %v118, 0
    %vm121 = vmand %vm120, %vm119
    %v122 = vadd.s32 %v118, 16
    %v123 = vsel %vm121, %v122, %v118
    %vm124 = vcmp.eq.s32.totalorder %v123, %v91
    %vm125 = vcmp.eq.s32.totalorder %v123, %v111
    %v126 = vsel %vm124, 1.0, 0.0
    %v127 = vsel %vm125, 1.0, 0.0
    %v128 = vld [vmem:[%s1] sm:$0xf]
    %v129 = vld [vmem:[%s7] sm:$0xff]
    %vm130 = vcmask 64512
    %v132 = vsel %vm130, %v128, 0
    %134 = vmatprep.subr.mxu0 0.0
    %135 = vmatpush1.msra.mxu0 %v129
    %136 = vmatprep.subr.mxu0 0.0
    %137 = vmatpush1.msra.mxu0 0.0
    %138 = vmatprep.subr.mxu0 0.0
    %139 = vmatpush1.msra.mxu0 0.0
    %140 = vmatprep.subr.mxu0 0.0
    %141 = vmatpush1.msra.mxu0 0.0
    %142 = vmatprep.subr.mxu0 0.0
    %143 = vmatpush1.msra.mxu0 0.0
    %144 = vmatprep.subr.mxu0 0.0
    %145 = vmatpush1.msra.mxu0 0.0
    %146 = vmatprep.subr.mxu0 0.0
    %147 = vmatpush1.msra.mxu0 0.0
    %148 = vmatprep.subr.mxu0 0.0
    %149 = vmatpush1.msra.mxu0 0.0
    %150 = vmatprep.subr.mxu0 0.0
    %151 = vmatpush1.msra.mxu0 0.0
    %152 = vmatprep.subr.mxu0 0.0
    %153 = vmatpush1.msra.mxu0 0.0
    %154 = vmatprep.subr.mxu0 0.0
    %155 = vmatpush1.msra.mxu0 0.0
    %156 = vmatprep.subr.mxu0 0.0
    %157 = vmatpush1.msra.mxu0 0.0
    %158 = vmatprep.subr.mxu0 0.0
    %159 = vmatpush1.msra.mxu0 0.0
    %160 = vmatprep.subr.mxu0 0.0
    %161 = vmatpush1.msra.mxu0 0.0
    %162 = vmatprep.subr.mxu0 0.0
    %163 = vmatpush1.msra.mxu0 0.0
    %164 = vmatprep.subr.mxu0 0.0
    %165 = vmatpush1.msra.mxu0 0.0
    %166 = vmatprep.subr.mxu0 0.0
    %167 = vmatpush1.msra.mxu0 0.0
    %168 = vmatprep.subr.mxu0 0.0
    %169 = vmatpush1.msra.mxu0 0.0
    %170 = vmatprep.subr.mxu0 0.0
    %171 = vmatpush1.msra.mxu0 0.0
    %172 = vmatprep.subr.mxu0 0.0
    %173 = vmatpush1.msra.mxu0 0.0
    %174 = vmatprep.subr.mxu0 0.0
    %175 = vmatpush1.msra.mxu0 0.0
    %176 = vmatprep.subr.mxu0 0.0
    %177 = vmatpush1.msra.mxu0 0.0
    %178 = vmatprep.subr.mxu0 0.0
    %179 = vmatpush1.msra.mxu0 0.0
    %180 = vmatprep.subr.mxu0 0.0
    %181 = vmatpush1.msra.mxu0 0.0
    %182 = vmatprep.subr.mxu0 0.0
    %183 = vmatpush1.msra.mxu0 0.0
    %184 = vmatprep.subr.mxu0 0.0
    %185 = vmatpush1.msra.mxu0 0.0
    %186 = vmatprep.subr.mxu0 0.0
    %187 = vmatpush1.msra.mxu0 0.0
    %188 = vmatprep.subr.mxu0 0.0
    %189 = vmatpush1.msra.mxu0 0.0
    %190 = vmatprep.subr.mxu0 0.0
    %191 = vmatpush1.msra.mxu0 0.0
    %192 = vmatprep.subr.mxu0 0.0
    %193 = vmatpush1.msra.mxu0 0.0
    %194 = vmatprep.subr.mxu0 0.0
    %195 = vmatpush1.msra.mxu0 0.0
    %196 = vmatprep.subr.mxu0 0.0
    %197 = vmatpush1.msra.mxu0 0.0
    %198 = vmatprep.mubr.f32.mxu0 0.0
    %199 = vmatmul.mubr.f32.gmra.mrb[0].mxu0 %v132
    %v200 = vpop.f32.mrb[0].mxu0
    %v201 = vadd.f32 0.0, %v200
    %v202 = vpop.f32.mrb[0].mxu0
    %203 = vdwg.mxu0
    %v204 = vadd.s32 %v93, 128
    %v205 = vadd.s32 %v93, 256
    %207 = vrot.lane.b32.xlu0 %v59, 16
    %v208 = vpop.permute.xlu0 %207
    %vm209 = vcmask 31744
    %v211 = vsel %vm209, %v110, 0
    %vm213 = vcmask 1043456
    %v214 = vsel %vm213, %v208, 0
    %216 = vmatprep.subr.mxu0 0.0
    %217 = vmatpush1.msra.mxu0 %v214
    %218 = vmatprep.subr.mxu0 0.0
    %219 = vmatpush1.msra.mxu0 0.0
    %220 = vmatprep.subr.mxu0 0.0
    %221 = vmatpush1.msra.mxu0 0.0
    %222 = vmatprep.subr.mxu0 0.0
    %223 = vmatpush1.msra.mxu0 0.0
    %224 = vmatprep.subr.mxu0 0.0
    %225 = vmatpush1.msra.mxu0 0.0
    %226 = vmatprep.subr.mxu0 0.0
    %227 = vmatpush1.msra.mxu0 0.0
    %228 = vmatprep.subr.mxu0 0.0
    %229 = vmatpush1.msra.mxu0 0.0
    %230 = vmatprep.subr.mxu0 0.0
    %231 = vmatpush1.msra.mxu0 0.0
    %232 = vmatprep.subr.mxu0 0.0
    %233 = vmatpush1.msra.mxu0 0.0
    %234 = vmatprep.subr.mxu0 0.0
    %235 = vmatpush1.msra.mxu0 0.0
    %236 = vmatprep.subr.mxu0 0.0
    %237 = vmatpush1.msra.mxu0 0.0
    %238 = vmatprep.subr.mxu0 0.0
    %239 = vmatpush1.msra.mxu0 0.0
    %240 = vmatprep.subr.mxu0 0.0
    %241 = vmatpush1.msra.mxu0 0.0
    %242 = vmatprep.subr.mxu0 0.0
    %243 = vmatpush1.msra.mxu0 0.0
    %244 = vmatprep.subr.mxu0 0.0
    %245 = vmatpush1.msra.mxu0 0.0
    %246 = vmatprep.subr.mxu0 0.0
    %247 = vmatpush1.msra.mxu0 0.0
    %248 = vmatprep.subr.mxu0 0.0
    %249 = vmatpush1.msra.mxu0 0.0
    %250 = vmatprep.subr.mxu0 0.0
    %251 = vmatpush1.msra.mxu0 0.0
    %252 = vmatprep.subr.mxu0 0.0
    %253 = vmatpush1.msra.mxu0 0.0
    %254 = vmatprep.subr.mxu0 0.0
    %255 = vmatpush1.msra.mxu0 0.0
    %256 = vmatprep.subr.mxu0 0.0
    %257 = vmatpush1.msra.mxu0 0.0
    %258 = vmatprep.subr.mxu0 0.0
    %259 = vmatpush1.msra.mxu0 0.0
    %260 = vmatprep.subr.mxu0 0.0
    %261 = vmatpush1.msra.mxu0 0.0
    %262 = vmatprep.subr.mxu0 0.0
    %263 = vmatpush1.msra.mxu0 0.0
    %264 = vmatprep.subr.mxu0 0.0
    %265 = vmatpush1.msra.mxu0 0.0
    %266 = vmatprep.subr.mxu0 0.0
    %267 = vmatpush1.msra.mxu0 0.0
    %268 = vmatprep.subr.mxu0 0.0
    %269 = vmatpush1.msra.mxu0 0.0
    %270 = vmatprep.subr.mxu0 0.0
    %271 = vmatpush1.msra.mxu0 0.0
    %272 = vmatprep.subr.mxu0 0.0
    %273 = vmatpush1.msra.mxu0 0.0
    %274 = vmatprep.subr.mxu0 0.0
    %275 = vmatpush1.msra.mxu0 0.0
    %276 = vmatprep.subr.mxu0 0.0
    %277 = vmatpush1.msra.mxu0 0.0
    %278 = vmatprep.subr.mxu0 0.0
    %279 = vmatpush1.msra.mxu0 0.0
    %280 = vmatprep.mubr.f32.mxu0 0.0
    %281 = vmatmul.mubr.f32.gmra.mrb[0].mxu0 %v211
    %v282 = vpop.f32.mrb[0].mxu0
    %v283 = vadd.f32 0.0, %v282
    %v284 = vpop.f32.mrb[0].mxu0
    %285 = vdwg.mxu0
    %vm286 = vcmask 261120
    %v287 = vsel %vm286, %v59, 0
    %289 = vmatprep.subr.mxu0 0.0
    %290 = vmatpush1.msra.mxu0 %v84
    %291 = vmatprep.subr.mxu0 0.0
    %292 = vmatpush1.msra.mxu0 %v85
    %293 = vmatprep.subr.mxu0 0.0
    %294 = vmatpush1.msra.mxu0 %v86
    %295 = vmatprep.subr.mxu0 0.0
    %296 = vmatpush1.msra.mxu0 %v87
    %297 = vmatprep.subr.mxu0 0.0
    %298 = vmatpush1.msra.mxu0 0.0
    %299 = vmatprep.subr.mxu0 0.0
    %300 = vmatpush1.msra.mxu0 0.0
    %301 = vmatprep.subr.mxu0 0.0
    %302 = vmatpush1.msra.mxu0 0.0
    %303 = vmatprep.subr.mxu0 0.0
    %304 = vmatpush1.msra.mxu0 0.0
    %305 = vmatprep.subr.mxu0 0.0
    %306 = vmatpush1.msra.mxu0 0.0
    %307 = vmatprep.subr.mxu0 0.0
    %308 = vmatpush1.msra.mxu0 0.0
    %309 = vmatprep.subr.mxu0 0.0
    %310 = vmatpush1.msra.mxu0 0.0
    %311 = vmatprep.subr.mxu0 0.0
    %312 = vmatpush1.msra.mxu0 0.0
    %313 = vmatprep.subr.mxu0 0.0
    %314 = vmatpush1.msra.mxu0 0.0
    %315 = vmatprep.subr.mxu0 0.0
    %316 = vmatpush1.msra.mxu0 0.0
    %317 = vmatprep.subr.mxu0 0.0
    %318 = vmatpush1.msra.mxu0 0.0
    %319 = vmatprep.subr.mxu0 0.0
    %320 = vmatpush1.msra.mxu0 0.0
    %321 = vmatprep.subr.mxu0 0.0
    %322 = vmatpush1.msra.mxu0 0.0
    %323 = vmatprep.subr.mxu0 0.0
    %324 = vmatpush1.msra.mxu0 0.0
    %325 = vmatprep.subr.mxu0 0.0
    %326 = vmatpush1.msra.mxu0 0.0
    %327 = vmatprep.subr.mxu0 0.0
    %328 = vmatpush1.msra.mxu0 0.0
    %329 = vmatprep.subr.mxu0 0.0
    %330 = vmatpush1.msra.mxu0 0.0
    %331 = vmatprep.subr.mxu0 0.0
    %332 = vmatpush1.msra.mxu0 0.0
    %333 = vmatprep.subr.mxu0 0.0
    %334 = vmatpush1.msra.mxu0 0.0
    %335 = vmatprep.subr.mxu0 0.0
    %336 = vmatpush1.msra.mxu0 0.0
    %337 = vmatprep.subr.mxu0 0.0
    %338 = vmatpush1.msra.mxu0 0.0
    %339 = vmatprep.subr.mxu0 0.0
    %340 = vmatpush1.msra.mxu0 0.0
    %341 = vmatprep.subr.mxu0 0.0
    %342 = vmatpush1.msra.mxu0 0.0
    %343 = vmatprep.subr.mxu0 0.0
    %344 = vmatpush1.msra.mxu0 0.0
    %345 = vmatprep.subr.mxu0 0.0
    %346 = vmatpush1.msra.mxu0 0.0
    %347 = vmatprep.subr.mxu0 0.0
    %348 = vmatpush1.msra.mxu0 0.0
    %349 = vmatprep.subr.mxu0 0.0
    %350 = vmatpush1.msra.mxu0 0.0
    %351 = vmatprep.subr.mxu0 0.0
    %352 = vmatpush1.msra.mxu0 0.0
    %353 = vmatprep.mubr.f32.mxu0 0.0
    %354 = vmatmul.mubr.f32.gmra.mrb[0].mxu0 %v287
    %v355 = vpop.f32.mrb[0].mxu0
    %v356 = vadd.f32 0.0, %v355
    %v357 = vpop.f32.mrb[0].mxu0
    %358 = vdwg.mxu0
    %vm359 = vcmask 130048
    %v361 = vsel %vm359, %v283, 0
    %363 = vmatprep.subr.mxu0 0.0
    %364 = vmatpush1.msra.mxu0 %v82
    %365 = vmatprep.subr.mxu0 0.0
    %366 = vmatpush1.msra.mxu0 %v83
    %367 = vmatprep.subr.mxu0 0.0
    %368 = vmatpush1.msra.mxu0 0.0
    %369 = vmatprep.subr.mxu0 0.0
    %370 = vmatpush1.msra.mxu0 0.0
    %371 = vmatprep.subr.mxu0 0.0
    %372 = vmatpush1.msra.mxu0 0.0
    %373 = vmatprep.subr.mxu0 0.0
    %374 = vmatpush1.msra.mxu0 0.0
    %375 = vmatprep.subr.mxu0 0.0
    %376 = vmatpush1.msra.mxu0 0.0
    %377 = vmatprep.subr.mxu0 0.0
    %378 = vmatpush1.msra.mxu0 0.0
    %379 = vmatprep.subr.mxu0 0.0
    %380 = vmatpush1.msra.mxu0 0.0
    %381 = vmatprep.subr.mxu0 0.0
    %382 = vmatpush1.msra.mxu0 0.0
    %383 = vmatprep.subr.mxu0 0.0
    %384 = vmatpush1.msra.mxu0 0.0
    %385 = vmatprep.subr.mxu0 0.0
    %386 = vmatpush1.msra.mxu0 0.0
    %387 = vmatprep.subr.mxu0 0.0
    %388 = vmatpush1.msra.mxu0 0.0
    %389 = vmatprep.subr.mxu0 0.0
    %390 = vmatpush1.msra.mxu0 0.0
    %391 = vmatprep.subr.mxu0 0.0
    %392 = vmatpush1.msra.mxu0 0.0
    %393 = vmatprep.subr.mxu0 0.0
    %394 = vmatpush1.msra.mxu0 0.0
    %395 = vmatprep.subr.mxu0 0.0
    %396 = vmatpush1.msra.mxu0 0.0
    %397 = vmatprep.subr.mxu0 0.0
    %398 = vmatpush1.msra.mxu0 0.0
    %399 = vmatprep.subr.mxu0 0.0
    %400 = vmatpush1.msra.mxu0 0.0
    %401 = vmatprep.subr.mxu0 0.0
    %402 = vmatpush1.msra.mxu0 0.0
    %403 = vmatprep.subr.mxu0 0.0
    %404 = vmatpush1.msra.mxu0 0.0
    %405 = vmatprep.subr.mxu0 0.0
    %406 = vmatpush1.msra.mxu0 0.0
    %407 = vmatprep.subr.mxu0 0.0
    %408 = vmatpush1.msra.mxu0 0.0
    %409 = vmatprep.subr.mxu0 0.0
    %410 = vmatpush1.msra.mxu0 0.0
    %411 = vmatprep.subr.mxu0 0.0
    %412 = vmatpush1.msra.mxu0 0.0
    %413 = vmatprep.subr.mxu0 0.0
    %414 = vmatpush1.msra.mxu0 0.0
    %415 = vmatprep.subr.mxu0 0.0
    %416 = vmatpush1.msra.mxu0 0.0
    %417 = vmatprep.subr.mxu0 0.0
    %418 = vmatpush1.msra.mxu0 0.0
    %419 = vmatprep.subr.mxu0 0.0
    %420 = vmatpush1.msra.mxu0 0.0
    %421 = vmatprep.subr.mxu0 0.0
    %422 = vmatpush1.msra.mxu0 0.0
    %423 = vmatprep.subr.mxu0 0.0
    %424 = vmatpush1.msra.mxu0 0.0
    %425 = vmatprep.subr.mxu0 0.0
    %426 = vmatpush1.msra.mxu0 0.0
    %427 = vmatprep.mubr.f32.mxu0 0.0
    %428 = vmatmul.mubr.f32.gmra.mrb[0].mxu0 %v361
    %v429 = vpop.f32.mrb[0].mxu0
    %v430 = vadd.f32 %v356, %v429
    %v431 = vpop.f32.mrb[0].mxu0
    %432 = vdwg.mxu0
    %v434 = vlaneseq
    %v435 = vshrl.u32 %v434, 7
    %v436 = vsub.s32 0, %v435
    %v437 = vrot.slane %v60, %v436
    %v439 = vadd.f32 %v430, %v437
    %v440 = vmax.f32 %v439, 0.0
    %v442 = vlaneseq
    %v443 = vshrl.u32 %v442, 7
    %v444 = vsub.s32 0, %v443
    %v445 = vrot.slane %v61, %v444
    %vm447 = vcmask 523264
    %v449 = vsel %vm447, %v440, 0
    %451 = vmatprep.subr.mxu0 0.0
    %452 = vmatpush1.msra.mxu0 %v62
    %453 = vmatprep.subr.mxu0 0.0
    %454 = vmatpush1.msra.mxu0 %v63
    %455 = vmatprep.subr.mxu0 0.0
    %456 = vmatpush1.msra.mxu0 %v64
    %457 = vmatprep.subr.mxu0 0.0
    %458 = vmatpush1.msra.mxu0 %v65
    %459 = vmatprep.subr.mxu0 0.0
    %460 = vmatpush1.msra.mxu0 %v66
    %461 = vmatprep.subr.mxu0 0.0
    %462 = vmatpush1.msra.mxu0 %v67
    %463 = vmatprep.subr.mxu0 0.0
    %464 = vmatpush1.msra.mxu0 %v68
    %465 = vmatprep.subr.mxu0 0.0
    %466 = vmatpush1.msra.mxu0 %v69
    %467 = vmatprep.subr.mxu0 0.0
    %468 = vmatpush1.msra.mxu0 0.0
    %469 = vmatprep.subr.mxu0 0.0
    %470 = vmatpush1.msra.mxu0 0.0
    %471 = vmatprep.subr.mxu0 0.0
    %472 = vmatpush1.msra.mxu0 0.0
    %473 = vmatprep.subr.mxu0 0.0
    %474 = vmatpush1.msra.mxu0 0.0
    %475 = vmatprep.subr.mxu0 0.0
    %476 = vmatpush1.msra.mxu0 0.0
    %477 = vmatprep.subr.mxu0 0.0
    %478 = vmatpush1.msra.mxu0 0.0
    %479 = vmatprep.subr.mxu0 0.0
    %480 = vmatpush1.msra.mxu0 0.0
    %481 = vmatprep.subr.mxu0 0.0
    %482 = vmatpush1.msra.mxu0 0.0
    %483 = vmatprep.subr.mxu0 0.0
    %484 = vmatpush1.msra.mxu0 0.0
    %485 = vmatprep.subr.mxu0 0.0
    %486 = vmatpush1.msra.mxu0 0.0
    %487 = vmatprep.subr.mxu0 0.0
    %488 = vmatpush1.msra.mxu0 0.0
    %489 = vmatprep.subr.mxu0 0.0
    %490 = vmatpush1.msra.mxu0 0.0
    %491 = vmatprep.subr.mxu0 0.0
    %492 = vmatpush1.msra.mxu0 0.0
    %493 = vmatprep.subr.mxu0 0.0
    %494 = vmatpush1.msra.mxu0 0.0
    %495 = vmatprep.subr.mxu0 0.0
    %496 = vmatpush1.msra.mxu0 0.0
    %497 = vmatprep.subr.mxu0 0.0
    %498 = vmatpush1.msra.mxu0 0.0
    %499 = vmatprep.subr.mxu0 0.0
    %500 = vmatpush1.msra.mxu0 0.0
    %501 = vmatprep.subr.mxu0 0.0
    %502 = vmatpush1.msra.mxu0 0.0
    %503 = vmatprep.subr.mxu0 0.0
    %504 = vmatpush1.msra.mxu0 0.0
    %505 = vmatprep.subr.mxu0 0.0
    %506 = vmatpush1.msra.mxu0 0.0
    %507 = vmatprep.subr.mxu0 0.0
    %508 = vmatpush1.msra.mxu0 0.0
    %509 = vmatprep.subr.mxu0 0.0
    %510 = vmatpush1.msra.mxu0 0.0
    %511 = vmatprep.subr.mxu0 0.0
    %512 = vmatpush1.msra.mxu0 0.0
    %513 = vmatprep.subr.mxu0 0.0
    %514 = vmatpush1.msra.mxu0 0.0
    %515 = vmatprep.mubr.f32.mxu0 0.0
    %516 = vmatmul.mubr.f32.gmra.mrb[0].mxu0 %v449
    %v517 = vpop.f32.mrb[0].mxu0
    %v518 = vadd.f32 %v445, %v517
    %v519 = vpop.f32.mrb[0].mxu0
    %520 = vdwg.mxu0
    %vm521 = vcmask 93184
    %522 = vst.msk [vmem:[%s18] sm:$0xf] %vm521, %v518
    %vm523 = vcmask 97280
    %v525 = vsel %vm523, %v518, 0
    %v528 = vsel %vm213, %v71, 0
    %530 = vmatprep.subr.mxu0 0.0
    %531 = vmatpush1.msra.mxu0 %v70
    %532 = vmatprep.subr.mxu0 0.0
    %533 = vmatpush1.msra.mxu0 %v528
    %534 = vmatprep.subr.mxu0 0.0
    %535 = vmatpush1.msra.mxu0 0.0
    %536 = vmatprep.subr.mxu0 0.0
    %537 = vmatpush1.msra.mxu0 0.0
    %538 = vmatprep.subr.mxu0 0.0
    %539 = vmatpush1.msra.mxu0 0.0
    %540 = vmatprep.subr.mxu0 0.0
    %541 = vmatpush1.msra.mxu0 0.0
    %542 = vmatprep.subr.mxu0 0.0
    %543 = vmatpush1.msra.mxu0 0.0
    %544 = vmatprep.subr.mxu0 0.0
    %545 = vmatpush1.msra.mxu0 0.0
    %546 = vmatprep.subr.mxu0 0.0
    %547 = vmatpush1.msra.mxu0 0.0
    %548 = vmatprep.subr.mxu0 0.0
    %549 = vmatpush1.msra.mxu0 0.0
    %550 = vmatprep.subr.mxu0 0.0
    %551 = vmatpush1.msra.mxu0 0.0
    %552 = vmatprep.subr.mxu0 0.0
    %553 = vmatpush1.msra.mxu0 0.0
    %554 = vmatprep.subr.mxu0 0.0
    %555 = vmatpush1.msra.mxu0 0.0
    %556 = vmatprep.subr.mxu0 0.0
    %557 = vmatpush1.msra.mxu0 0.0
    %558 = vmatprep.subr.mxu0 0.0
    %559 = vmatpush1.msra.mxu0 0.0
    %560 = vmatprep.subr.mxu0 0.0
    %561 = vmatpush1.msra.mxu0 0.0
    %562 = vmatprep.subr.mxu0 0.0
    %563 = vmatpush1.msra.mxu0 0.0
    %564 = vmatprep.subr.mxu0 0.0
    %565 = vmatpush1.msra.mxu0 0.0
    %566 = vmatprep.subr.mxu0 0.0
    %567 = vmatpush1.msra.mxu0 0.0
    %568 = vmatprep.subr.mxu0 0.0
    %569 = vmatpush1.msra.mxu0 0.0
    %570 = vmatprep.subr.mxu0 0.0
    %571 = vmatpush1.msra.mxu0 0.0
    %572 = vmatprep.subr.mxu0 0.0
    %573 = vmatpush1.msra.mxu0 0.0
    %574 = vmatprep.subr.mxu0 0.0
    %575 = vmatpush1.msra.mxu0 0.0
    %576 = vmatprep.subr.mxu0 0.0
    %577 = vmatpush1.msra.mxu0 0.0
    %578 = vmatprep.subr.mxu0 0.0
    %579 = vmatpush1.msra.mxu0 0.0
    %580 = vmatprep.subr.mxu0 0.0
    %581 = vmatpush1.msra.mxu0 0.0
    %582 = vmatprep.subr.mxu0 0.0
    %583 = vmatpush1.msra.mxu0 0.0
    %584 = vmatprep.subr.mxu0 0.0
    %585 = vmatpush1.msra.mxu0 0.0
    %586 = vmatprep.subr.mxu0 0.0
    %587 = vmatpush1.msra.mxu0 0.0
    %588 = vmatprep.subr.mxu0 0.0
    %589 = vmatpush1.msra.mxu0 0.0
    %590 = vmatprep.subr.mxu0 0.0
    %591 = vmatpush1.msra.mxu0 0.0
    %592 = vmatprep.subr.mxu0 0.0
    %593 = vmatpush1.msra.mxu0 0.0
    %594 = vmatprep.mubr.f32.mxu0 0.0
    %595 = vmatmul.mubr.f32.gmra.mrb[0].mxu0 %v525
    %v596 = vpop.f32.mrb[0].mxu0
    %v597 = vadd.f32 0.0, %v596
    %v598 = vpop.f32.mrb[0].mxu0
    %599 = vdwg.mxu0
    %v600 = vadd.f32 %v597, %v201
    %v602 = vlaneseq
    %v603 = vshrl.u32 %v602, 7
    %v604 = vsub.s32 0, %v603
    %v605 = vrot.slane %v72, %v604
    %v607 = vadd.f32 %v600, %v605
    %v608 = vmax.f32 %v607, 0.0
    %v610 = vlaneseq
    %v611 = vshrl.u32 %v610, 7
    %v612 = vsub.s32 0, %v611
    %v613 = vrot.slane %v73, %v612
    %v615 = vmul.f32 %v608, %v613
    %vm616 = vcmask 257024
    %v617 = vsel %vm616, %v615, 0.0
    %618 = vadd.xlane.f32.xlu0 %v617
    %v619 = vpop.xlane.xlu0 %618
    %v621 = vlaneseq
    %v622 = vshrl.u32 %v621, 7
    %v623 = vsub.s32 0, %v622
    %v624 = vrot.slane %v74, %v623
    %v626 = vadd.f32 %v619, %v624
    %vm627 = vcmp.le.f32.partialorder %v626, 0.0
    %v628 = vsel %vm627, 0.0, %v626
    %v629 = vmax.f32 %v628, 0.0
    %v630 = vmin.f32 %v629, 1.0
    %v631 = vmul.f32 %v630, 255.0
    %v632 = vround.ne.pseudo %v631
    %v633 = vadd.f32 %v632, 1.0
    %v634 = vsel %vm627, 0.0, %v633
    %v635 = vcvt.f32.s32.to.zero.pseudo %v634
    %636 = vset.pattern.permute.xlu0 0
    %637 = vperm.xlu0 %636, %v635
    %v638 = vpop.permute.xlu0 %637
    %vm639 = vcmp.eq.s32.totalorder %v93, %v638
    %vm640 = vcmp.eq.s32.totalorder %v204, %v638
    %vm641 = vcmp.eq.s32.totalorder %v205, %v638
    %v642 = vsel %vm639, 1, 0
    %v643 = vsel %vm640, 1, 0
    %v644 = vsel %vm641, 1, 0
    %v645 = vcvt.s32.f32 %v642
    %v646 = vcvt.s32.f32 %v643
    %v647 = vcvt.s32.f32 %v644
    %v651 = vcombine.low %v645, %v646
    %v653 = vunpack.c.l.s4 1966171168
    %v654 = vunpack.c.0.s8 %v653
    %v655 = vlaneseq
    %v656 = vshrl.u32 %v655, 7
    %v657 = vsub.s32 %v654, %v656
    %v658 = vrot.slane %v651, %v657
    %v660 = vunpack.c.l.s4 1966171168
    %v661 = vunpack.c.0.s8 %v660
    %v662 = vlaneseq
    %v663 = vshrl.u32 %v662, 7
    %v664 = vsub.s32 %v661, %v663
    %v665 = vrot.slane %v647, %v664
    %v666 = vcombine.low %v658, %v665
    %v667 = vcombine.high %v658, %v665
    %v669 = vunpack.c.l.s4 1966171168
    %v670 = vunpack.c.0.s8 %v669
    %v671 = vlaneseq
    %v672 = vshrl.u32 %v671, 7
    %v673 = vsub.s32 %v670, %v672
    %v674 = vrot.slane %v666, %v673
    %v676 = vunpack.c.l.s4 1966171168
    %v677 = vunpack.c.0.s8 %v676
    %v678 = vlaneseq
    %v679 = vshrl.u32 %v678, 7
    %v680 = vsub.s32 %v677, %v679
    %v681 = vrot.slane %v667, %v680
    %v682 = vcombine.high %v674, %v674
    %v683 = vcombine.high %v681, %v681
    %v684 = vlaneseq
    %v685 = vshrl.u32 %v684, 7
    %v686 = vsub.s32 0, %v685
    %v687 = vrot.slane %v674, %v686
    %v688 = vlaneseq
    %v689 = vshrl.u32 %v688, 7
    %v690 = vsub.s32 1, %v689
    %v691 = vrot.slane %v674, %v690
    %v692 = vlaneseq
    %v693 = vshrl.u32 %v692, 7
    %v694 = vsub.s32 2, %v693
    %v695 = vrot.slane %v674, %v694
    %v696 = vlaneseq
    %v697 = vshrl.u32 %v696, 7
    %v698 = vsub.s32 0, %v697
    %v699 = vrot.slane %v681, %v698
    %v700 = vlaneseq
    %v701 = vshrl.u32 %v700, 7
    %v702 = vsub.s32 1, %v701
    %v703 = vrot.slane %v681, %v702
    %v704 = vlaneseq
    %v705 = vshrl.u32 %v704, 7
    %v706 = vsub.s32 2, %v705
    %v707 = vrot.slane %v681, %v706
    %v708 = vlaneseq
    %v709 = vshrl.u32 %v708, 7
    %v710 = vsub.s32 0, %v709
    %v711 = vrot.slane %v682, %v710
    %v712 = vlaneseq
    %v713 = vshrl.u32 %v712, 7
    %v714 = vsub.s32 1, %v713
    %v715 = vrot.slane %v682, %v714
    %v716 = vlaneseq
    %v717 = vshrl.u32 %v716, 7
    %v718 = vsub.s32 2, %v717
    %v719 = vrot.slane %v682, %v718
    %v720 = vlaneseq
    %v721 = vshrl.u32 %v720, 7
    %v722 = vsub.s32 0, %v721
    %v723 = vrot.slane %v683, %v722
    %v724 = vlaneseq
    %v725 = vshrl.u32 %v724, 7
    %v726 = vsub.s32 1, %v725
    %v727 = vrot.slane %v683, %v726
    %v728 = vlaneseq
    %v729 = vshrl.u32 %v728, 7
    %v730 = vsub.s32 2, %v729
    %v731 = vrot.slane %v683, %v730
    %744 = vst [vmem:[#allocation3] sm:$0xff] %v687
    %745 = vst [vmem:[#allocation3 + $0x8] sm:$0xff] %v691
    %746 = vst [vmem:[#allocation3 + $0x10] sm:$0xff] %v695
    %747 = vst [vmem:[#allocation3 + $0x18] sm:$0xff] %v699
    %748 = vst [vmem:[#allocation3 + $0x20] sm:$0xff] %v703
    %749 = vst [vmem:[#allocation3 + $0x28] sm:$0xff] %v707
    %750 = vst [vmem:[#allocation3 + $0x30] sm:$0xff] %v711
    %751 = vst [vmem:[#allocation3 + $0x38] sm:$0xff] %v715
    %752 = vst [vmem:[#allocation3 + $0x40] sm:$0xff] %v719
    %753 = vst [vmem:[#allocation3 + $0x48] sm:$0xff] %v723
    %754 = vst [vmem:[#allocation3 + $0x50] sm:$0xff] %v727
    %755 = vst [vmem:[#allocation3 + $0x58] sm:$0xff] %v731
    %757 = vset.pattern.permute.xlu0 0
    %758 = vperm.xlu0 %757, %v626
    %v759 = vpop.permute.xlu0 %758
    %v762 = vlaneseq
    %v763 = vshrl.u32 %v762, 7
    %v764 = vsub.s32 0, %v763
    %v765 = vrot.slane %v75, %v764
    %v767 = vmul.f32 %v759, %v765
    %769 = vrot.lane.b32.xlu0 %v767, 32
    %v770 = vpop.permute.xlu0 %769
    %v772 = vadd.f32 %v597, %v770
    %v774 = vlaneseq
    %v775 = vshrl.u32 %v774, 7
    %v776 = vsub.s32 0, %v775
    %v777 = vrot.slane %v76, %v776
    %778 = vrot.lane.b32.xlu0 %v777, 32
    %v779 = vpop.permute.xlu0 %778
    %v781 = vadd.f32 %v772, %v779
    %v782 = vmax.f32 %v781, 0.0
    %v784 = vlaneseq
    %v785 = vshrl.u32 %v784, 7
    %v786 = vsub.s32 0, %v785
    %v787 = vrot.slane %v81, %v786
    %790 = vrot.lane.b32.xlu0 %v782, 96
    %v791 = vpop.permute.xlu0 %790
    %v792 = vsel %vm286, %v791, 0
    %794 = vmatprep.subr.mxu0 0.0
    %795 = vmatpush1.msra.mxu0 %v77
    %796 = vmatprep.subr.mxu0 0.0
    %797 = vmatpush1.msra.mxu0 %v78
    %798 = vmatprep.subr.mxu0 0.0
    %799 = vmatpush1.msra.mxu0 %v79
    %800 = vmatprep.subr.mxu0 0.0
    %801 = vmatpush1.msra.mxu0 %v80
    %802 = vmatprep.subr.mxu0 0.0
    %803 = vmatpush1.msra.mxu0 0.0
    %804 = vmatprep.subr.mxu0 0.0
    %805 = vmatpush1.msra.mxu0 0.0
    %806 = vmatprep.subr.mxu0 0.0
    %807 = vmatpush1.msra.mxu0 0.0
    %808 = vmatprep.subr.mxu0 0.0
    %809 = vmatpush1.msra.mxu0 0.0
    %810 = vmatprep.subr.mxu0 0.0
    %811 = vmatpush1.msra.mxu0 0.0
    %812 = vmatprep.subr.mxu0 0.0
    %813 = vmatpush1.msra.mxu0 0.0
    %814 = vmatprep.subr.mxu0 0.0
    %815 = vmatpush1.msra.mxu0 0.0
    %816 = vmatprep.subr.mxu0 0.0
    %817 = vmatpush1.msra.mxu0 0.0
    %818 = vmatprep.subr.mxu0 0.0
    %819 = vmatpush1.msra.mxu0 0.0
    %820 = vmatprep.subr.mxu0 0.0
    %821 = vmatpush1.msra.mxu0 0.0
    %822 = vmatprep.subr.mxu0 0.0
    %823 = vmatpush1.msra.mxu0 0.0
    %824 = vmatprep.subr.mxu0 0.0
    %825 = vmatpush1.msra.mxu0 0.0
    %826 = vmatprep.subr.mxu0 0.0
    %827 = vmatpush1.msra.mxu0 0.0
    %828 = vmatprep.subr.mxu0 0.0
    %829 = vmatpush1.msra.mxu0 0.0
    %830 = vmatprep.subr.mxu0 0.0
    %831 = vmatpush1.msra.mxu0 0.0
    %832 = vmatprep.subr.mxu0 0.0
    %833 = vmatpush1.msra.mxu0 0.0
    %834 = vmatprep.subr.mxu0 0.0
    %835 = vmatpush1.msra.mxu0 0.0
    %836 = vmatprep.subr.mxu0 0.0
    %837 = vmatpush1.msra.mxu0 0.0
    %838 = vmatprep.subr.mxu0 0.0
    %839 = vmatpush1.msra.mxu0 0.0
    %840 = vmatprep.subr.mxu0 0.0
    %841 = vmatpush1.msra.mxu0 0.0
    %842 = vmatprep.subr.mxu0 0.0
    %843 = vmatpush1.msra.mxu0 0.0
    %844 = vmatprep.subr.mxu0 0.0
    %845 = vmatpush1.msra.mxu0 0.0
    %846 = vmatprep.subr.mxu0 0.0
    %847 = vmatpush1.msra.mxu0 0.0
    %848 = vmatprep.subr.mxu0 0.0
    %849 = vmatpush1.msra.mxu0 0.0
    %850 = vmatprep.subr.mxu0 0.0
    %851 = vmatpush1.msra.mxu0 0.0
    %852 = vmatprep.subr.mxu0 0.0
    %853 = vmatpush1.msra.mxu0 0.0
    %854 = vmatprep.subr.mxu0 0.0
    %855 = vmatpush1.msra.mxu0 0.0
    %856 = vmatprep.subr.mxu0 0.0
    %857 = vmatpush1.msra.mxu0 0.0
    %858 = vmatprep.mubr.f32.mxu0 0.0
    %859 = vmatmul.mubr.f32.gmra.mrb[0].mxu0 %v792
    %v860 = vpop.f32.mrb[0].mxu0
    %v861 = vadd.f32 %v787, %v860
    %v862 = vpop.f32.mrb[0].mxu0
    %863 = vdwg.mxu0
    %v865 = vsel %vm359, %v861, 0
    %867 = vmatprep.subr.mxu0 0.0
    %868 = vmatpush1.msra.mxu0 %v126
    %869 = vmatprep.subr.mxu0 0.0
    %870 = vmatpush1.msra.mxu0 %v127
    %871 = vmatprep.subr.mxu0 0.0
    %872 = vmatpush1.msra.mxu0 0.0
    %873 = vmatprep.subr.mxu0 0.0
    %874 = vmatpush1.msra.mxu0 0.0
    %875 = vmatprep.subr.mxu0 0.0
    %876 = vmatpush1.msra.mxu0 0.0
    %877 = vmatprep.subr.mxu0 0.0
    %878 = vmatpush1.msra.mxu0 0.0
    %879 = vmatprep.subr.mxu0 0.0
    %880 = vmatpush1.msra.mxu0 0.0
    %881 = vmatprep.subr.mxu0 0.0
    %882 = vmatpush1.msra.mxu0 0.0
    %883 = vmatprep.subr.mxu0 0.0
    %884 = vmatpush1.msra.mxu0 0.0
    %885 = vmatprep.subr.mxu0 0.0
    %886 = vmatpush1.msra.mxu0 0.0
    %887 = vmatprep.subr.mxu0 0.0
    %888 = vmatpush1.msra.mxu0 0.0
    %889 = vmatprep.subr.mxu0 0.0
    %890 = vmatpush1.msra.mxu0 0.0
    %891 = vmatprep.subr.mxu0 0.0
    %892 = vmatpush1.msra.mxu0 0.0
    %893 = vmatprep.subr.mxu0 0.0
    %894 = vmatpush1.msra.mxu0 0.0
    %895 = vmatprep.subr.mxu0 0.0
    %896 = vmatpush1.msra.mxu0 0.0
    %897 = vmatprep.subr.mxu0 0.0
    %898 = vmatpush1.msra.mxu0 0.0
    %899 = vmatprep.subr.mxu0 0.0
    %900 = vmatpush1.msra.mxu0 0.0
    %901 = vmatprep.subr.mxu0 0.0
    %902 = vmatpush1.msra.mxu0 0.0
    %903 = vmatprep.subr.mxu0 0.0
    %904 = vmatpush1.msra.mxu0 0.0
    %905 = vmatprep.subr.mxu0 0.0
    %906 = vmatpush1.msra.mxu0 0.0
    %907 = vmatprep.subr.mxu0 0.0
    %908 = vmatpush1.msra.mxu0 0.0
    %909 = vmatprep.subr.mxu0 0.0
    %910 = vmatpush1.msra.mxu0 0.0
    %911 = vmatprep.subr.mxu0 0.0
    %912 = vmatpush1.msra.mxu0 0.0
    %913 = vmatprep.subr.mxu0 0.0
    %914 = vmatpush1.msra.mxu0 0.0
    %915 = vmatprep.subr.mxu0 0.0
    %916 = vmatpush1.msra.mxu0 0.0
    %917 = vmatprep.subr.mxu0 0.0
    %918 = vmatpush1.msra.mxu0 0.0
    %919 = vmatprep.subr.mxu0 0.0
    %920 = vmatpush1.msra.mxu0 0.0
    %921 = vmatprep.subr.mxu0 0.0
    %922 = vmatpush1.msra.mxu0 0.0
    %923 = vmatprep.subr.mxu0 0.0
    %924 = vmatpush1.msra.mxu0 0.0
    %925 = vmatprep.subr.mxu0 0.0
    %926 = vmatpush1.msra.mxu0 0.0
    %927 = vmatprep.subr.mxu0 0.0
    %928 = vmatpush1.msra.mxu0 0.0
    %929 = vmatprep.subr.mxu0 0.0
    %930 = vmatpush1.msra.mxu0 0.0
    %931 = vmatprep.mubr.f32.mxu0 0.0
    %932 = vmatmul.mubr.f32.gmra.mrb[0].mxu0 %v865
    %v933 = vpop.f32.mrb[0].mxu0
    %v934 = vadd.f32 0.0, %v933
    %v935 = vpop.f32.mrb[0].mxu0
    %936 = vdwg.mxu0
    %937 = vst [vmem:[%s15] sm:$0xf] %v934
    %v938 = vsel %vm213, %v861, 0
    %940 = vmatprep.subr.mxu0 0.0
    %941 = vmatpush1.msra.mxu0 %v938
    %942 = vmatprep.subr.mxu0 0.0
    %943 = vmatpush1.msra.mxu0 0.0
    %944 = vmatprep.subr.mxu0 0.0
    %945 = vmatpush1.msra.mxu0 0.0
    %946 = vmatprep.subr.mxu0 0.0
    %947 = vmatpush1.msra.mxu0 0.0
    %948 = vmatprep.subr.mxu0 0.0
    %949 = vmatpush1.msra.mxu0 0.0
    %950 = vmatprep.subr.mxu0 0.0
    %951 = vmatpush1.msra.mxu0 0.0
    %952 = vmatprep.subr.mxu0 0.0
    %953 = vmatpush1.msra.mxu0 0.0
    %954 = vmatprep.subr.mxu0 0.0
    %955 = vmatpush1.msra.mxu0 0.0
    %956 = vmatprep.subr.mxu0 0.0
    %957 = vmatpush1.msra.mxu0 0.0
    %958 = vmatprep.subr.mxu0 0.0
    %959 = vmatpush1.msra.mxu0 0.0
    %960 = vmatprep.subr.mxu0 0.0
    %961 = vmatpush1.msra.mxu0 0.0
    %962 = vmatprep.subr.mxu0 0.0
    %963 = vmatpush1.msra.mxu0 0.0
    %964 = vmatprep.subr.mxu0 0.0
    %965 = vmatpush1.msra.mxu0 0.0
    %966 = vmatprep.subr.mxu0 0.0
    %967 = vmatpush1.msra.mxu0 0.0
    %968 = vmatprep.subr.mxu0 0.0
    %969 = vmatpush1.msra.mxu0 0.0
    %970 = vmatprep.subr.mxu0 0.0
    %971 = vmatpush1.msra.mxu0 0.0
    %972 = vmatprep.subr.mxu0 0.0
    %973 = vmatpush1.msra.mxu0 0.0
    %974 = vmatprep.subr.mxu0 0.0
    %975 = vmatpush1.msra.mxu0 0.0
    %976 = vmatprep.subr.mxu0 0.0
    %977 = vmatpush1.msra.mxu0 0.0
    %978 = vmatprep.subr.mxu0 0.0
    %979 = vmatpush1.msra.mxu0 0.0
    %980 = vmatprep.subr.mxu0 0.0
    %981 = vmatpush1.msra.mxu0 0.0
    %982 = vmatprep.subr.mxu0 0.0
    %983 = vmatpush1.msra.mxu0 0.0
    %984 = vmatprep.subr.mxu0 0.0
    %985 = vmatpush1.msra.mxu0 0.0
    %986 = vmatprep.subr.mxu0 0.0
    %987 = vmatpush1.msra.mxu0 0.0
    %988 = vmatprep.subr.mxu0 0.0
    %989 = vmatpush1.msra.mxu0 0.0
    %990 = vmatprep.subr.mxu0 0.0
    %991 = vmatpush1.msra.mxu0 0.0
    %992 = vmatprep.subr.mxu0 0.0
    %993 = vmatpush1.msra.mxu0 0.0
    %994 = vmatprep.subr.mxu0 0.0
    %995 = vmatpush1.msra.mxu0 0.0
    %996 = vmatprep.subr.mxu0 0.0
    %997 = vmatpush1.msra.mxu0 0.0
    %998 = vmatprep.subr.mxu0 0.0
    %999 = vmatpush1.msra.mxu0 0.0
    %1000 = vmatprep.subr.mxu0 0.0
    %1001 = vmatpush1.msra.mxu0 0.0
    %1002 = vmatprep.subr.mxu0 0.0
    %1003 = vmatpush1.msra.mxu0 0.0
    %1004 = vmatprep.mubr.f32.mxu0 0.0
    %1005 = vmatmul.mubr.f32.gmra.mrb[0].mxu0 %v211
    %v1006 = vpop.f32.mrb[0].mxu0
    %v1007 = vadd.f32 0.0, %v1006
    %v1008 = vpop.f32.mrb[0].mxu0
    %1009 = vdwg.mxu0
    %1010 = vmatprep.subr.mxu0 0.0
    %1011 = vmatpush1.msra.mxu0 %v88
    %1012 = vmatprep.subr.mxu0 0.0
    %1013 = vmatpush1.msra.mxu0 %v89
    %1014 = vmatprep.subr.mxu0 0.0
    %1015 = vmatpush1.msra.mxu0 0.0
    %1016 = vmatprep.subr.mxu0 0.0
    %1017 = vmatpush1.msra.mxu0 0.0
    %1018 = vmatprep.subr.mxu0 0.0
    %1019 = vmatpush1.msra.mxu0 0.0
    %1020 = vmatprep.subr.mxu0 0.0
    %1021 = vmatpush1.msra.mxu0 0.0
    %1022 = vmatprep.subr.mxu0 0.0
    %1023 = vmatpush1.msra.mxu0 0.0
    %1024 = vmatprep.subr.mxu0 0.0
    %1025 = vmatpush1.msra.mxu0 0.0
    %1026 = vmatprep.subr.mxu0 0.0
    %1027 = vmatpush1.msra.mxu0 0.0
    %1028 = vmatprep.subr.mxu0 0.0
    %1029 = vmatpush1.msra.mxu0 0.0
    %1030 = vmatprep.subr.mxu0 0.0
    %1031 = vmatpush1.msra.mxu0 0.0
    %1032 = vmatprep.subr.mxu0 0.0
    %1033 = vmatpush1.msra.mxu0 0.0
    %1034 = vmatprep.subr.mxu0 0.0
    %1035 = vmatpush1.msra.mxu0 0.0
    %1036 = vmatprep.subr.mxu0 0.0
    %1037 = vmatpush1.msra.mxu0 0.0
    %1038 = vmatprep.subr.mxu0 0.0
    %1039 = vmatpush1.msra.mxu0 0.0
    %1040 = vmatprep.subr.mxu0 0.0
    %1041 = vmatpush1.msra.mxu0 0.0
    %1042 = vmatprep.subr.mxu0 0.0
    %1043 = vmatpush1.msra.mxu0 0.0
    %1044 = vmatprep.subr.mxu0 0.0
    %1045 = vmatpush1.msra.mxu0 0.0
    %1046 = vmatprep.subr.mxu0 0.0
    %1047 = vmatpush1.msra.mxu0 0.0
    %1048 = vmatprep.subr.mxu0 0.0
    %1049 = vmatpush1.msra.mxu0 0.0
    %1050 = vmatprep.subr.mxu0 0.0
    %1051 = vmatpush1.msra.mxu0 0.0
    %1052 = vmatprep.subr.mxu0 0.0
    %1053 = vmatpush1.msra.mxu0 0.0
    %1054 = vmatprep.subr.mxu0 0.0
    %1055 = vmatpush1.msra.mxu0 0.0
    %1056 = vmatprep.subr.mxu0 0.0
    %1057 = vmatpush1.msra.mxu0 0.0
    %1058 = vmatprep.subr.mxu0 0.0
    %1059 = vmatpush1.msra.mxu0 0.0
    %1060 = vmatprep.subr.mxu0 0.0
    %1061 = vmatpush1.msra.mxu0 0.0
    %1062 = vmatprep.subr.mxu0 0.0
    %1063 = vmatpush1.msra.mxu0 0.0
    %1064 = vmatprep.subr.mxu0 0.0
    %1065 = vmatpush1.msra.mxu0 0.0
    %1066 = vmatprep.subr.mxu0 0.0
    %1067 = vmatpush1.msra.mxu0 0.0
    %1068 = vmatprep.subr.mxu0 0.0
    %1069 = vmatpush1.msra.mxu0 0.0
    %1070 = vmatprep.subr.mxu0 0.0
    %1071 = vmatpush1.msra.mxu0 0.0
    %1072 = vmatprep.subr.mxu0 0.0
    %1073 = vmatpush1.msra.mxu0 0.0
    %1074 = vmatprep.mubr.f32.mxu0 0.0
    %1075 = vmatmul.mubr.f32.gmra.mrb[0].mxu0 %v865
    %v1076 = vpop.f32.mrb[0].mxu0
    %v1077 = vadd.f32 0.0, %v1076
    %v1078 = vpop.f32.mrb[0].mxu0
    %1079 = vdwg.mxu0
    %v1081 = vsel %vm359, %v1007, 0
    %1083 = vmatprep.subr.mxu0 0.0
    %1084 = vmatpush1.msra.mxu0 %v82
    %1085 = vmatprep.subr.mxu0 0.0
    %1086 = vmatpush1.msra.mxu0 %v83
    %1087 = vmatprep.subr.mxu0 0.0
    %1088 = vmatpush1.msra.mxu0 0.0
    %1089 = vmatprep.subr.mxu0 0.0
    %1090 = vmatpush1.msra.mxu0 0.0
    %1091 = vmatprep.subr.mxu0 0.0
    %1092 = vmatpush1.msra.mxu0 0.0
    %1093 = vmatprep.subr.mxu0 0.0
    %1094 = vmatpush1.msra.mxu0 0.0
    %1095 = vmatprep.subr.mxu0 0.0
    %1096 = vmatpush1.msra.mxu0 0.0
    %1097 = vmatprep.subr.mxu0 0.0
    %1098 = vmatpush1.msra.mxu0 0.0
    %1099 = vmatprep.subr.mxu0 0.0
    %1100 = vmatpush1.msra.mxu0 0.0
    %1101 = vmatprep.subr.mxu0 0.0
    %1102 = vmatpush1.msra.mxu0 0.0
    %1103 = vmatprep.subr.mxu0 0.0
    %1104 = vmatpush1.msra.mxu0 0.0
    %1105 = vmatprep.subr.mxu0 0.0
    %1106 = vmatpush1.msra.mxu0 0.0
    %1107 = vmatprep.subr.mxu0 0.0
    %1108 = vmatpush1.msra.mxu0 0.0
    %1109 = vmatprep.subr.mxu0 0.0
    %1110 = vmatpush1.msra.mxu0 0.0
    %1111 = vmatprep.subr.mxu0 0.0
    %1112 = vmatpush1.msra.mxu0 0.0
    %1113 = vmatprep.subr.mxu0 0.0
    %1114 = vmatpush1.msra.mxu0 0.0
    %1115 = vmatprep.subr.mxu0 0.0
    %1116 = vmatpush1.msra.mxu0 0.0
    %1117 = vmatprep.subr.mxu0 0.0
    %1118 = vmatpush1.msra.mxu0 0.0
    %1119 = vmatprep.subr.mxu0 0.0
    %1120 = vmatpush1.msra.mxu0 0.0
    %1121 = vmatprep.subr.mxu0 0.0
    %1122 = vmatpush1.msra.mxu0 0.0
    %1123 = vmatprep.subr.mxu0 0.0
    %1124 = vmatpush1.msra.mxu0 0.0
    %1125 = vmatprep.subr.mxu0 0.0
    %1126 = vmatpush1.msra.mxu0 0.0
    %1127 = vmatprep.subr.mxu0 0.0
    %1128 = vmatpush1.msra.mxu0 0.0
    %1129 = vmatprep.subr.mxu0 0.0
    %1130 = vmatpush1.msra.mxu0 0.0
    %1131 = vmatprep.subr.mxu0 0.0
    %1132 = vmatpush1.msra.mxu0 0.0
    %1133 = vmatprep.subr.mxu0 0.0
    %1134 = vmatpush1.msra.mxu0 0.0
    %1135 = vmatprep.subr.mxu0 0.0
    %1136 = vmatpush1.msra.mxu0 0.0
    %1137 = vmatprep.subr.mxu0 0.0
    %1138 = vmatpush1.msra.mxu0 0.0
    %1139 = vmatprep.subr.mxu0 0.0
    %1140 = vmatpush1.msra.mxu0 0.0
    %1141 = vmatprep.subr.mxu0 0.0
    %1142 = vmatpush1.msra.mxu0 0.0
    %1143 = vmatprep.subr.mxu0 0.0
    %1144 = vmatpush1.msra.mxu0 0.0
    %1145 = vmatprep.subr.mxu0 0.0
    %1146 = vmatpush1.msra.mxu0 0.0
    %1147 = vmatprep.mubr.f32.mxu0 0.0
    %1148 = vmatmul.mubr.f32.gmra.mrb[0].mxu0 %v1081
    %v1149 = vpop.f32.mrb[0].mxu0
    %v1150 = vadd.f32 %v1077, %v1149
    %v1151 = vpop.f32.mrb[0].mxu0
    %1152 = vdwg.mxu0
    %v1153 = vadd.f32 %v1150, %v437
    %v1154 = vmax.f32 %v1153, 0.0
    %v1156 = vsel %vm447, %v1154, 0
    %1158 = vmatprep.subr.mxu0 0.0
    %1159 = vmatpush1.msra.mxu0 %v62
    %1160 = vmatprep.subr.mxu0 0.0
    %1161 = vmatpush1.msra.mxu0 %v63
    %1162 = vmatprep.subr.mxu0 0.0
    %1163 = vmatpush1.msra.mxu0 %v64
    %1164 = vmatprep.subr.mxu0 0.0
    %1165 = vmatpush1.msra.mxu0 %v65
    %1166 = vmatprep.subr.mxu0 0.0
    %1167 = vmatpush1.msra.mxu0 %v66
    %1168 = vmatprep.subr.mxu0 0.0
    %1169 = vmatpush1.msra.mxu0 %v67
    %1170 = vmatprep.subr.mxu0 0.0
    %1171 = vmatpush1.msra.mxu0 %v68
    %1172 = vmatprep.subr.mxu0 0.0
    %1173 = vmatpush1.msra.mxu0 %v69
    %1174 = vmatprep.subr.mxu0 0.0
    %1175 = vmatpush1.msra.mxu0 0.0
    %1176 = vmatprep.subr.mxu0 0.0
    %1177 = vmatpush1.msra.mxu0 0.0
    %1178 = vmatprep.subr.mxu0 0.0
    %1179 = vmatpush1.msra.mxu0 0.0
    %1180 = vmatprep.subr.mxu0 0.0
    %1181 = vmatpush1.msra.mxu0 0.0
    %1182 = vmatprep.subr.mxu0 0.0
    %1183 = vmatpush1.msra.mxu0 0.0
    %1184 = vmatprep.subr.mxu0 0.0
    %1185 = vmatpush1.msra.mxu0 0.0
    %1186 = vmatprep.subr.mxu0 0.0
    %1187 = vmatpush1.msra.mxu0 0.0
    %1188 = vmatprep.subr.mxu0 0.0
    %1189 = vmatpush1.msra.mxu0 0.0
    %1190 = vmatprep.subr.mxu0 0.0
    %1191 = vmatpush1.msra.mxu0 0.0
    %1192 = vmatprep.subr.mxu0 0.0
    %1193 = vmatpush1.msra.mxu0 0.0
    %1194 = vmatprep.subr.mxu0 0.0
    %1195 = vmatpush1.msra.mxu0 0.0
    %1196 = vmatprep.subr.mxu0 0.0
    %1197 = vmatpush1.msra.mxu0 0.0
    %1198 = vmatprep.subr.mxu0 0.0
    %1199 = vmatpush1.msra.mxu0 0.0
    %1200 = vmatprep.subr.mxu0 0.0
    %1201 = vmatpush1.msra.mxu0 0.0
    %1202 = vmatprep.subr.mxu0 0.0
    %1203 = vmatpush1.msra.mxu0 0.0
    %1204 = vmatprep.subr.mxu0 0.0
    %1205 = vmatpush1.msra.mxu0 0.0
    %1206 = vmatprep.subr.mxu0 0.0
    %1207 = vmatpush1.msra.mxu0 0.0
    %1208 = vmatprep.subr.mxu0 0.0
    %1209 = vmatpush1.msra.mxu0 0.0
    %1210 = vmatprep.subr.mxu0 0.0
    %1211 = vmatpush1.msra.mxu0 0.0
    %1212 = vmatprep.subr.mxu0 0.0
    %1213 = vmatpush1.msra.mxu0 0.0
    %1214 = vmatprep.subr.mxu0 0.0
    %1215 = vmatpush1.msra.mxu0 0.0
    %1216 = vmatprep.subr.mxu0 0.0
    %1217 = vmatpush1.msra.mxu0 0.0
    %1218 = vmatprep.subr.mxu0 0.0
    %1219 = vmatpush1.msra.mxu0 0.0
    %1220 = vmatprep.subr.mxu0 0.0
    %1221 = vmatpush1.msra.mxu0 0.0
    %1222 = vmatprep.mubr.f32.mxu0 0.0
    %1223 = vmatmul.mubr.f32.gmra.mrb[0].mxu0 %v1156
    %v1224 = vpop.f32.mrb[0].mxu0
    %v1225 = vadd.f32 %v445, %v1224
    %v1226 = vpop.f32.mrb[0].mxu0
    %1227 = vdwg.mxu0
    %1228 = vst.msk [vmem:[%s19] sm:$0xf] %vm521, %v1225
    %v1230 = vsel %vm523, %v1225, 0
    %1232 = vmatprep.subr.mxu0 0.0
    %1233 = vmatpush1.msra.mxu0 %v70
    %1234 = vmatprep.subr.mxu0 0.0
    %1235 = vmatpush1.msra.mxu0 %v528
    %1236 = vmatprep.subr.mxu0 0.0
    %1237 = vmatpush1.msra.mxu0 0.0
    %1238 = vmatprep.subr.mxu0 0.0
    %1239 = vmatpush1.msra.mxu0 0.0
    %1240 = vmatprep.subr.mxu0 0.0
    %1241 = vmatpush1.msra.mxu0 0.0
    %1242 = vmatprep.subr.mxu0 0.0
    %1243 = vmatpush1.msra.mxu0 0.0
    %1244 = vmatprep.subr.mxu0 0.0
    %1245 = vmatpush1.msra.mxu0 0.0
    %1246 = vmatprep.subr.mxu0 0.0
    %1247 = vmatpush1.msra.mxu0 0.0
    %1248 = vmatprep.subr.mxu0 0.0
    %1249 = vmatpush1.msra.mxu0 0.0
    %1250 = vmatprep.subr.mxu0 0.0
    %1251 = vmatpush1.msra.mxu0 0.0
    %1252 = vmatprep.subr.mxu0 0.0
    %1253 = vmatpush1.msra.mxu0 0.0
    %1254 = vmatprep.subr.mxu0 0.0
    %1255 = vmatpush1.msra.mxu0 0.0
    %1256 = vmatprep.subr.mxu0 0.0
    %1257 = vmatpush1.msra.mxu0 0.0
    %1258 = vmatprep.subr.mxu0 0.0
    %1259 = vmatpush1.msra.mxu0 0.0
    %1260 = vmatprep.subr.mxu0 0.0
    %1261 = vmatpush1.msra.mxu0 0.0
    %1262 = vmatprep.subr.mxu0 0.0
    %1263 = vmatpush1.msra.mxu0 0.0
    %1264 = vmatprep.subr.mxu0 0.0
    %1265 = vmatpush1.msra.mxu0 0.0
    %1266 = vmatprep.subr.mxu0 0.0
    %1267 = vmatpush1.msra.mxu0 0.0
    %1268 = vmatprep.subr.mxu0 0.0
    %1269 = vmatpush1.msra.mxu0 0.0
    %1270 = vmatprep.subr.mxu0 0.0
    %1271 = vmatpush1.msra.mxu0 0.0
    %1272 = vmatprep.subr.mxu0 0.0
    %1273 = vmatpush1.msra.mxu0 0.0
    %1274 = vmatprep.subr.mxu0 0.0
    %1275 = vmatpush1.msra.mxu0 0.0
    %1276 = vmatprep.subr.mxu0 0.0
    %1277 = vmatpush1.msra.mxu0 0.0
    %1278 = vmatprep.subr.mxu0 0.0
    %1279 = vmatpush1.msra.mxu0 0.0
    %1280 = vmatprep.subr.mxu0 0.0
    %1281 = vmatpush1.msra.mxu0 0.0
    %1282 = vmatprep.subr.mxu0 0.0
    %1283 = vmatpush1.msra.mxu0 0.0
    %1284 = vmatprep.subr.mxu0 0.0
    %1285 = vmatpush1.msra.mxu0 0.0
    %1286 = vmatprep.subr.mxu0 0.0
    %1287 = vmatpush1.msra.mxu0 0.0
    %1288 = vmatprep.subr.mxu0 0.0
    %1289 = vmatpush1.msra.mxu0 0.0
    %1290 = vmatprep.subr.mxu0 0.0
    %1291 = vmatpush1.msra.mxu0 0.0
    %1292 = vmatprep.subr.mxu0 0.0
    %1293 = vmatpush1.msra.mxu0 0.0
    %1294 = vmatprep.subr.mxu0 0.0
    %1295 = vmatpush1.msra.mxu0 0.0
    %1296 = vmatprep.mubr.f32.mxu0 0.0
    %1297 = vmatmul.mubr.f32.gmra.mrb[0].mxu0 %v1230
    %v1298 = vpop.f32.mrb[0].mxu0
    %v1299 = vadd.f32 0.0, %v1298
    %v1300 = vpop.f32.mrb[0].mxu0
    %1301 = vdwg.mxu0
    %v1302 = vadd.f32 %v1299, %v201
    %v1303 = vadd.f32 %v1302, %v605
    %v1304 = vmax.f32 %v1303, 0.0
    %v1305 = vmul.f32 %v1304, %v613
    %v1306 = vsel %vm616, %v1305, 0.0
    %1307 = vadd.xlane.f32.xlu0 %v1306
    %v1308 = vpop.xlane.xlu0 %1307
    %v1309 = vadd.f32 %v1308, %v624
    %vm1310 = vcmp.le.f32.partialorder %v1309, 0.0
    %v1311 = vsel %vm1310, 0.0, %v1309
    %v1312 = vmax.f32 %v1311, 0.0
    %v1313 = vmin.f32 %v1312, 1.0
    %v1314 = vmul.f32 %v1313, 255.0
    %v1315 = vround.ne.pseudo %v1314
    %v1316 = vadd.f32 %v1315, 1.0
    %v1317 = vsel %vm1310, 0.0, %v1316
    %v1318 = vcvt.f32.s32.to.zero.pseudo %v1317
    %1319 = vset.pattern.permute.xlu0 0
    %1320 = vperm.xlu0 %1319, %v1318
    %v1321 = vpop.permute.xlu0 %1320
    %vm1322 = vcmp.eq.s32.totalorder %v93, %v1321
    %vm1323 = vcmp.eq.s32.totalorder %v204, %v1321
    %vm1324 = vcmp.eq.s32.totalorder %v205, %v1321
    %v1325 = vsel %vm1322, 1, 0
    %v1326 = vsel %vm1323, 1, 0
    %v1327 = vsel %vm1324, 1, 0
    %v1328 = vcvt.s32.f32 %v1325
    %v1329 = vcvt.s32.f32 %v1326
    %v1330 = vcvt.s32.f32 %v1327
    %v1334 = vcombine.low %v1328, %v1329
    %v1336 = vunpack.c.l.s4 1966171168
    %v1337 = vunpack.c.0.s8 %v1336
    %v1338 = vlaneseq
    %v1339 = vshrl.u32 %v1338, 7
    %v1340 = vsub.s32 %v1337, %v1339
    %v1341 = vrot.slane %v1334, %v1340
    %v1343 = vunpack.c.l.s4 1966171168
    %v1344 = vunpack.c.0.s8 %v1343
    %v1345 = vlaneseq
    %v1346 = vshrl.u32 %v1345, 7
    %v1347 = vsub.s32 %v1344, %v1346
    %v1348 = vrot.slane %v1330, %v1347
    %v1349 = vcombine.low %v1341, %v1348
    %v1350 = vcombine.high %v1341, %v1348
    %v1352 = vunpack.c.l.s4 1966171168
    %v1353 = vunpack.c.0.s8 %v1352
    %v1354 = vlaneseq
    %v1355 = vshrl.u32 %v1354, 7
    %v1356 = vsub.s32 %v1353, %v1355
    %v1357 = vrot.slane %v1349, %v1356
    %v1359 = vunpack.c.l.s4 1966171168
    %v1360 = vunpack.c.0.s8 %v1359
    %v1361 = vlaneseq
    %v1362 = vshrl.u32 %v1361, 7
    %v1363 = vsub.s32 %v1360, %v1362
    %v1364 = vrot.slane %v1350, %v1363
    %v1365 = vcombine.high %v1357, %v1357
    %v1366 = vcombine.high %v1364, %v1364
    %v1367 = vlaneseq
    %v1368 = vshrl.u32 %v1367, 7
    %v1369 = vsub.s32 0, %v1368
    %v1370 = vrot.slane %v1357, %v1369
    %v1371 = vlaneseq
    %v1372 = vshrl.u32 %v1371, 7
    %v1373 = vsub.s32 1, %v1372
    %v1374 = vrot.slane %v1357, %v1373
    %v1375 = vlaneseq
    %v1376 = vshrl.u32 %v1375, 7
    %v1377 = vsub.s32 2, %v1376
    %v1378 = vrot.slane %v1357, %v1377
    %v1379 = vlaneseq
    %v1380 = vshrl.u32 %v1379, 7
    %v1381 = vsub.s32 0, %v1380
    %v1382 = vrot.slane %v1364, %v1381
    %v1383 = vlaneseq
    %v1384 = vshrl.u32 %v1383, 7
    %v1385 = vsub.s32 1, %v1384
    %v1386 = vrot.slane %v1364, %v1385
    %v1387 = vlaneseq
    %v1388 = vshrl.u32 %v1387, 7
    %v1389 = vsub.s32 2, %v1388
    %v1390 = vrot.slane %v1364, %v1389
    %v1391 = vlaneseq
    %v1392 = vshrl.u32 %v1391, 7
    %v1393 = vsub.s32 0, %v1392
    %v1394 = vrot.slane %v1365, %v1393
    %v1395 = vlaneseq
    %v1396 = vshrl.u32 %v1395, 7
    %v1397 = vsub.s32 1, %v1396
    %v1398 = vrot.slane %v1365, %v1397
    %v1399 = vlaneseq
    %v1400 = vshrl.u32 %v1399, 7
    %v1401 = vsub.s32 2, %v1400
    %v1402 = vrot.slane %v1365, %v1401
    %v1403 = vlaneseq
    %v1404 = vshrl.u32 %v1403, 7
    %v1405 = vsub.s32 0, %v1404
    %v1406 = vrot.slane %v1366, %v1405
    %v1407 = vlaneseq
    %v1408 = vshrl.u32 %v1407, 7
    %v1409 = vsub.s32 1, %v1408
    %v1410 = vrot.slane %v1366, %v1409
    %v1411 = vlaneseq
    %v1412 = vshrl.u32 %v1411, 7
    %v1413 = vsub.s32 2, %v1412
    %v1414 = vrot.slane %v1366, %v1413
    %1427 = vst [vmem:[#allocation5] sm:$0xff] %v1370
    %1428 = vst [vmem:[#allocation5 + $0x8] sm:$0xff] %v1374
    %1429 = vst [vmem:[#allocation5 + $0x10] sm:$0xff] %v1378
    %1430 = vst [vmem:[#allocation5 + $0x18] sm:$0xff] %v1382
    %1431 = vst [vmem:[#allocation5 + $0x20] sm:$0xff] %v1386
    %1432 = vst [vmem:[#allocation5 + $0x28] sm:$0xff] %v1390
    %1433 = vst [vmem:[#allocation5 + $0x30] sm:$0xff] %v1394
    %1434 = vst [vmem:[#allocation5 + $0x38] sm:$0xff] %v1398
    %1435 = vst [vmem:[#allocation5 + $0x40] sm:$0xff] %v1402
    %1436 = vst [vmem:[#allocation5 + $0x48] sm:$0xff] %v1406
    %1437 = vst [vmem:[#allocation5 + $0x50] sm:$0xff] %v1410
    %1438 = vst [vmem:[#allocation5 + $0x58] sm:$0xff] %v1414
    // Predicated region
    $region62: #{generator_forward.1} parent=1 // pred_check
      _
    $region63: #{generator_forward.1} parent=1 // pred_check_branch
      %1440 = sbr.rel (0) target = $region65
    $region64: #{generator_forward.1} parent=1 // pred_region
      _
    $region65: #{generator_forward.1} parent=1 // pred_fallthru
      _
    // Predicated region
    $region66: #{generator_forward.1} parent=1 // pred_check
      _
    $region67: #{generator_forward.1} parent=1 // pred_check_branch
      %1442 = sbr.rel (0) target = $region69
    $region68: #{generator_forward.1} parent=1 // pred_region
      %s1444 = ssub.s32 1536, 1536
      %1445 = vsyncadd [#allocation4], %s1444
      %s1446 = sshll.u32 [#allocation3], 4
      %s1447 = int_to_ptr.vmem [resolvable:$true] %s1446
      %1452 = dma.vmem_to_hbm [thread:$0]  %s1447, 1536, %s16, [#allocation4], 384, 384, 24
    $region69: #{generator_forward.1} parent=1 // pred_fallthru
      _
    // Predicated region
    $region70: #{generator_forward.1} parent=1 // pred_check
      _
    $region71: #{generator_forward.1} parent=1 // pred_check_branch
      %1454 = sbr.rel (0) target = $region73
    $region72: #{generator_forward.1} parent=1 // pred_region
      %s1456 = ssub.s32 1536, 1536
      %1457 = vsyncadd [#allocation6], %s1456
      %s1458 = sshll.u32 [#allocation5], 4
      %s1459 = int_to_ptr.vmem [resolvable:$true] %s1458
      %1464 = dma.vmem_to_hbm [thread:$0]  %s1459, 1536, %s17, [#allocation6], 384, 384, 24
    $region73: #{generator_forward.1} parent=1 // pred_fallthru
      _
    // Predicated region
    $region74: #{generator_forward.1} parent=1 // pred_check
      _
    $region75: #{generator_forward.1} parent=1 // pred_check_branch
      %1466 = sbr.rel (0) target = $region77
    $region76: #{generator_forward.1} parent=1 // pred_region
      _
    $region77: #{generator_forward.1} parent=1 // pred_fallthru
      _
    // Predicated region
    $region78: #{generator_forward.1} parent=1 // pred_check
      _
    $region79: #{generator_forward.1} parent=1 // pred_check_branch
      %1468 = sbr.rel (0) target = $region81
    $region80: #{generator_forward.1} parent=1 // pred_region
      _
    $region81: #{generator_forward.1} parent=1 // pred_fallthru
      _
    // Predicated region
    $region82: #{generator_forward.1} parent=1 // pred_check
      _
    $region83: #{generator_forward.1} parent=1 // pred_check_branch
      %1470 = sbr.rel (0) target = $region85
    $region84: #{generator_forward.1} parent=1 // pred_region
      _
    $region85: #{generator_forward.1} parent=1 // pred_fallthru
      _
    // Predicated region
    $region86: #{generator_forward.1} parent=1 // pred_check
      _
    $region87: #{generator_forward.1} parent=1 // pred_check_branch
      %1472 = sbr.rel (0) target = $region89
    $region88: #{generator_forward.1} parent=1 // pred_region
      %1473 = dma.done [#allocation4], 1536
    $region89: #{generator_forward.1} parent=1 // pred_fallthru
      _
    // Predicated region
    $region90: #{generator_forward.1} parent=1 // pred_check
      _
    $region91: #{generator_forward.1} parent=1 // pred_check_branch
      %1475 = sbr.rel (0) target = $region93
    $region92: #{generator_forward.1} parent=1 // pred_region
      %1476 = dma.done [#allocation6], 1536
    $region93: #{generator_forward.1} parent=1 // pred_fallthru
      _
    // Predicated region
    $region94: #{generator_forward.1} parent=1 // pred_check
      _
    $region95: #{generator_forward.1} parent=1 // pred_check_branch
      %1478 = sbr.rel (0) target = $region97
    $region96: #{generator_forward.1} parent=1 // pred_region
      _
    $region97: #{generator_forward.1} parent=1 // pred_fallthru
      _
    // Predicated region
    $region98: #{generator_forward.1} parent=1 // pred_check
      _
    $region99: #{generator_forward.1} parent=1 // pred_check_branch
      %1480 = sbr.rel (0) target = $region101
    $region100: #{generator_forward.1} parent=1 // pred_region
      _
    $region101: #{generator_forward.1} parent=1 // pred_fallthru
      _
    %1481 = vsyncpa [#allocation4], 1
    %1482 = vsyncpa [#allocation6], 1

</llo_original>
